<compile_context>
chip_gen: v7x
topology: tpu7x:2x2x1
jax: 0.10.0
libtpu: 0.0.40
codegen_flags: <defaults>
</compile_context>

<pallas_src>
import jax
import jax.numpy as jnp
from jax.experimental import pallas as pl
from jax.experimental.pallas import tpu as pltpu


def _round_up(x, m):
    return ((x + m - 1) // m) * m


def attention_kernel(vi_ref, vq_ref, wi_ref, bi_ref, wq_ref, bq_ref,
                     wa_ref, ba_ref, rep_ref, rept_ref, u_ref):
    vi = vi_ref[...]                # (TB*L, Ep)  flattened image features
    vq = vq_ref[...]                # (TB, Ep)

    # ff_image over the whole (TB*L, Ep) slab -> one big MXU matmul.
    hi = jnp.dot(vi, wi_ref[...], preferred_element_type=jnp.float32) + bi_ref[...]

    # ff_questions batched over the TB block (single matmul for the block).
    hq = jnp.dot(vq, wq_ref[...], preferred_element_type=jnp.float32) + bq_ref[...]

    # Broadcast hq over the L region rows of each batch element using the
    # precomputed 0/1 replication matrix (tiny K=TB MXU op, stays 2-D).
    hq_full = jnp.dot(rep_ref[...], hq, preferred_element_type=jnp.float32)   # (TB*L, Cp)

    ha = jnp.tanh(hi + hq_full)                                               # (TB*L, Cp)
    # TODO(synk): nn.Dropout(p=0.5) omitted (eval-mode identity).

    # ff_attention has a single output unit: VPU multiply + lane reduce
    # instead of a 1-lane-output MXU matmul.
    logits = jnp.sum(ha * wa_ref[...], axis=-1, keepdims=True) + ba_ref[...]  # (TB*L, 1)

    # Softmax over regions (per batch element). Softmax is shift-invariant, so
    # subtracting the block-global max is mathematically identical to a
    # per-batch max and numerically safe (logits are tanh-bounded).
    m = jnp.max(logits, axis=0, keepdims=True)
    e = jnp.exp(logits - m)                                                   # (TB*L, 1)

    # Per-batch-element reductions as small MXU matmuls with the precomputed
    # (TB, TB*L) transposed replication matrix:
    #   num[b]   = sum_l e[b,l] * vi[b,l,:]     (unnormalized attended feature)
    #   denom[b] = sum_l e[b,l]                 (softmax denominator)
    num = jnp.dot(rept_ref[...], e * vi, preferred_element_type=jnp.float32)  # (TB, Ep)
    denom = jnp.dot(rept_ref[...], e, preferred_element_type=jnp.float32)     # (TB, 1)

    attended = num * pl.reciprocal(denom, approx=True)                        # (TB, Ep)
    u_ref[...] = attended + vq                                                # lane-dense store


def attention_forward(vi, vq, params, *, tb=8):
    B, L, E = vi.shape
    C = params["wi"].shape[1]
    LANE = 128
    assert (tb * L) % 8 == 0, "tb*L must be a multiple of 8 (sublane tiling)"

    nb = pl.cdiv(B, tb)
    Bp = nb * tb
    Ep = _round_up(E, LANE)   # lane-dense output / matmul dims
    Cp = _round_up(C, LANE)
    rows = tb * L

    # Zero-pad batch / embed / channel dims (all padding is mathematically
    # inert and sliced away at the end).
    vi_p = jnp.pad(vi, ((0, Bp - B), (0, 0), (0, Ep - E)))
    vq_p = jnp.pad(vq, ((0, Bp - B), (0, Ep - E)))
    wi_p = jnp.pad(params["wi"], ((0, Ep - E), (0, Cp - C)))
    bi_p = jnp.pad(params["bi"], ((0, 0), (0, Cp - C)))
    wq_p = jnp.pad(params["wq"], ((0, Ep - E), (0, Cp - C)))
    bq_p = jnp.pad(params["bq"], ((0, 0), (0, Cp - C)))
    wa_row = jnp.pad(params["wa"].reshape(1, C), ((0, 0), (0, Cp - C)))  # (1, Cp)
    ba = params["ba"]                                                    # (1, 1)

    # Flatten the image features in the wrapper so the kernel sees a clean
    # (tb*L, Ep) 2-D slab per grid step.
    vi_flat = vi_p.reshape(Bp * L, Ep)

    # Grid-invariant 0/1 replication matrices, built once here and kept
    # VMEM-resident across grid steps (constant index_map => no re-DMA and no
    # per-step iota/select work inside the kernel).
    seg = jnp.arange(rows, dtype=jnp.int32) // L
    rep = (seg[:, None] == jnp.arange(tb, dtype=jnp.int32)[None, :]).astype(jnp.float32)  # (rows, tb)
    rep_t = rep.T                                                                          # (tb, rows)

    out = pl.pallas_call(
        attention_kernel,
        out_shape=jax.ShapeDtypeStruct((Bp, Ep), jnp.float32),
        grid=(nb,),
        in_specs=[
            pl.BlockSpec((rows, Ep), lambda b: (b, 0)),     # vi (flattened)
            pl.BlockSpec((tb, Ep), lambda b: (b, 0)),       # vq
            pl.BlockSpec((Ep, Cp), lambda b: (0, 0)),       # W_image
            pl.BlockSpec((1, Cp), lambda b: (0, 0)),        # b_image
            pl.BlockSpec((Ep, Cp), lambda b: (0, 0)),       # W_question
            pl.BlockSpec((1, Cp), lambda b: (0, 0)),        # b_question
            pl.BlockSpec((1, Cp), lambda b: (0, 0)),        # W_attention (as row)
            pl.BlockSpec((1, 1), lambda b: (0, 0)),         # b_attention
            pl.BlockSpec((rows, tb), lambda b: (0, 0)),     # replication (rows, TB)
            pl.BlockSpec((tb, rows), lambda b: (0, 0)),     # replication^T (TB, rows)
        ],
        out_specs=pl.BlockSpec((tb, Ep), lambda b: (b, 0)),
        compiler_params=pltpu.CompilerParams(
            dimension_semantics=("parallel",)),
    )(vi_flat, vq_p, wi_p, bi_p, wq_p, bq_p, wa_row, ba, rep, rep_t)

    return out[:B, :E]


def attention_reference(vi, vq, params):
    hi = vi @ params["wi"] + params["bi"]                       # (B, L, C)
    hq = (vq @ params["wq"] + params["bq"])[:, None, :]         # (B, 1, C)
    ha = jnp.tanh(hi + hq)
    logits = ha @ params["wa"] + params["ba"]                   # (B, L, 1)
    pi = jax.nn.softmax(logits, axis=1)
    vi_attended = jnp.sum(pi * vi, axis=1)                      # (B, E)
    return vi_attended + vq


if __name__ == "__main__":
    B, L = 16, 16           # batch, number of image regions (tb=8 -> grid of 2)
    E, C = 32, 64           # embed_size, num_channels

    key = jax.random.PRNGKey(0)
    k_vi, k_vq, k_wi, k_bi, k_wq, k_bq, k_wa, k_ba = jax.random.split(key, 8)

    vi = jax.random.normal(k_vi, (B, L, E), dtype=jnp.float32)
    vq = jax.random.normal(k_vq, (B, E), dtype=jnp.float32)

    params = {
        "wi": jax.random.normal(k_wi, (E, C), dtype=jnp.float32) * 0.1,
        "bi": jax.random.normal(k_bi, (1, C), dtype=jnp.float32) * 0.1,
        "wq": jax.random.normal(k_wq, (E, C), dtype=jnp.float32) * 0.1,
        "bq": jax.random.normal(k_bq, (1, C), dtype=jnp.float32) * 0.1,
        "wa": jax.random.normal(k_wa, (C, 1), dtype=jnp.float32) * 0.1,
        "ba": jax.random.normal(k_ba, (1, 1), dtype=jnp.float32) * 0.1,
    }

    u = attention_forward(vi, vq, params, tb=8)
    u = jax.block_until_ready(u)

    u_ref = attention_reference(vi, vq, params)
    assert u.shape == (B, E)
    # Tolerance relaxed vs. exact f32 because the softmax denominator uses the
    # EUP approximate reciprocal (pl.reciprocal(approx=True)).
    assert jnp.allclose(u, u_ref, atol=2e-2, rtol=2e-2), "mismatch vs reference"

    print("KERNEL_OK")
</pallas_src>

<mosaic_0001>
module attributes {stable_mosaic.version = 11 : i64} {
  func.func @attention_kernel(%arg0: i32, %arg1: memref<128x128xf32, #tpu.memory_space<vmem>>, %arg2: memref<8x128xf32, #tpu.memory_space<vmem>>, %arg3: memref<128x128xf32, #tpu.memory_space<vmem>>, %arg4: memref<1x128xf32, #tpu.memory_space<vmem>>, %arg5: memref<128x128xf32, #tpu.memory_space<vmem>>, %arg6: memref<1x128xf32, #tpu.memory_space<vmem>>, %arg7: memref<1x128xf32, #tpu.memory_space<vmem>>, %arg8: memref<1x1xf32, #tpu.memory_space<vmem>>, %arg9: memref<128x8xf32, #tpu.memory_space<vmem>>, %arg10: memref<8x128xf32, #tpu.memory_space<vmem>>, %arg11: memref<8x128xf32, #tpu.memory_space<vmem>>) attributes {dimension_semantics = [#tpu.dimension_semantics<parallel>], iteration_bounds = array<i64: 2>, scalar_prefetch = 0 : i64, scratch_operands = 0 : i64, tpu.core_type = #tpu.core_type<tc>, window_params = [{transform_indices = @transform_0, window_bounds = array<i64: 128, 128>}, {transform_indices = @transform_1, window_bounds = array<i64: 8, 128>}, {pipeline_mode = #tpu.pipeline_mode<synchronous>, transform_indices = @transform_2, window_bounds = array<i64: 128, 128>}, {pipeline_mode = #tpu.pipeline_mode<synchronous>, transform_indices = @transform_3, window_bounds = array<i64: 1, 128>}, {pipeline_mode = #tpu.pipeline_mode<synchronous>, transform_indices = @transform_4, window_bounds = array<i64: 128, 128>}, {pipeline_mode = #tpu.pipeline_mode<synchronous>, transform_indices = @transform_5, window_bounds = array<i64: 1, 128>}, {pipeline_mode = #tpu.pipeline_mode<synchronous>, transform_indices = @transform_6, window_bounds = array<i64: 1, 128>}, {pipeline_mode = #tpu.pipeline_mode<synchronous>, transform_indices = @transform_7, window_bounds = array<i64: 1, 1>}, {pipeline_mode = #tpu.pipeline_mode<synchronous>, transform_indices = @transform_8, window_bounds = array<i64: 128, 8>}, {pipeline_mode = #tpu.pipeline_mode<synchronous>, transform_indices = @transform_9, window_bounds = array<i64: 8, 128>}, {transform_indices = @transform_10, window_bounds = array<i64: 8, 128>}]} {
    %c0 = arith.constant 0 : index
    %c0_0 = arith.constant 0 : index
    %0 = vector.load %arg1[%c0, %c0_0] : memref<128x128xf32, #tpu.memory_space<vmem>>, vector<128x128xf32>
    %c0_1 = arith.constant 0 : index
    %c0_2 = arith.constant 0 : index
    %1 = vector.load %arg2[%c0_1, %c0_2] : memref<8x128xf32, #tpu.memory_space<vmem>>, vector<8x128xf32>
    %c0_3 = arith.constant 0 : index
    %c0_4 = arith.constant 0 : index
    %2 = vector.load %arg3[%c0_3, %c0_4] : memref<128x128xf32, #tpu.memory_space<vmem>>, vector<128x128xf32>
    %cst = arith.constant dense<0.000000e+00> : vector<128x128xf32>
    %3 = tpu.matmul %0, %2, %cst {dimension_numbers = #tpu.dot_dimension_numbers<[1], [0], [0], [1], [0, 0, 1, 1], [], []>} : vector<128x128xf32>, vector<128x128xf32>, vector<128x128xf32> -> vector<128x128xf32>
    %c0_5 = arith.constant 0 : index
    %c0_6 = arith.constant 0 : index
    %4 = vector.load %arg4[%c0_5, %c0_6] : memref<1x128xf32, #tpu.memory_space<vmem>>, vector<1x128xf32>
    %5 = vector.broadcast %4 : vector<1x128xf32> to vector<128x128xf32>
    %6 = arith.addf %3, %5 : vector<128x128xf32>
    %c0_7 = arith.constant 0 : index
    %c0_8 = arith.constant 0 : index
    %7 = vector.load %arg5[%c0_7, %c0_8] : memref<128x128xf32, #tpu.memory_space<vmem>>, vector<128x128xf32>
    %cst_9 = arith.constant dense<0.000000e+00> : vector<8x128xf32>
    %8 = tpu.matmul %1, %7, %cst_9 {dimension_numbers = #tpu.dot_dimension_numbers<[1], [0], [0], [1], [0, 0, 1, 1], [], []>} : vector<8x128xf32>, vector<128x128xf32>, vector<8x128xf32> -> vector<8x128xf32>
    %c0_10 = arith.constant 0 : index
    %c0_11 = arith.constant 0 : index
    %9 = vector.load %arg6[%c0_10, %c0_11] : memref<1x128xf32, #tpu.memory_space<vmem>>, vector<1x128xf32>
    %10 = vector.broadcast %9 : vector<1x128xf32> to vector<8x128xf32>
    %11 = arith.addf %8, %10 : vector<8x128xf32>
    %c0_12 = arith.constant 0 : index
    %c0_13 = arith.constant 0 : index
    %12 = vector.load %arg9[%c0_12, %c0_13] : memref<128x8xf32, #tpu.memory_space<vmem>>, vector<128x8xf32>
    %cst_14 = arith.constant dense<0.000000e+00> : vector<128x128xf32>
    %13 = tpu.matmul %12, %11, %cst_14 {dimension_numbers = #tpu.dot_dimension_numbers<[1], [0], [0], [1], [0, 0, 1, 1], [], []>} : vector<128x8xf32>, vector<8x128xf32>, vector<128x128xf32> -> vector<128x128xf32>
    %14 = arith.addf %6, %13 : vector<128x128xf32>
    %15 = math.tanh %14 : vector<128x128xf32>
    %c0_15 = arith.constant 0 : index
    %c0_16 = arith.constant 0 : index
    %16 = vector.load %arg7[%c0_15, %c0_16] : memref<1x128xf32, #tpu.memory_space<vmem>>, vector<1x128xf32>
    %17 = vector.broadcast %16 : vector<1x128xf32> to vector<128x128xf32>
    %18 = arith.mulf %15, %17 : vector<128x128xf32>
    %cst_17 = arith.constant dense<0.000000e+00> : vector<128xf32>
    %19 = vector.multi_reduction <add>, %18, %cst_17 [1] : vector<128x128xf32> to vector<128xf32>
    %20 = vector.shape_cast %19 : vector<128xf32> to vector<128x1xf32>
    %c0_18 = arith.constant 0 : index
    %c0_19 = arith.constant 0 : index
    %21 = vector.load %arg8[%c0_18, %c0_19] : memref<1x1xf32, #tpu.memory_space<vmem>>, vector<1x1xf32>
    %22 = vector.broadcast %21 : vector<1x1xf32> to vector<128x1xf32>
    %23 = arith.addf %20, %22 : vector<128x1xf32>
    %cst_20 = arith.constant dense<0xFF800000> : vector<1xf32>
    %24 = vector.multi_reduction <maximumf>, %23, %cst_20 [0] : vector<128x1xf32> to vector<1xf32>
    %25 = vector.shape_cast %24 : vector<1xf32> to vector<1x1xf32>
    %26 = vector.broadcast %25 : vector<1x1xf32> to vector<128x1xf32>
    %27 = arith.subf %23, %26 : vector<128x1xf32>
    %28 = math.exp %27 : vector<128x1xf32>
    %c0_21 = arith.constant 0 : index
    %c0_22 = arith.constant 0 : index
    %29 = vector.load %arg10[%c0_21, %c0_22] : memref<8x128xf32, #tpu.memory_space<vmem>>, vector<8x128xf32>
    %30 = vector.broadcast %28 : vector<128x1xf32> to vector<128x128xf32>
    %31 = arith.mulf %30, %0 : vector<128x128xf32>
    %cst_23 = arith.constant dense<0.000000e+00> : vector<8x128xf32>
    %32 = tpu.matmul %29, %31, %cst_23 {dimension_numbers = #tpu.dot_dimension_numbers<[1], [0], [0], [1], [0, 0, 1, 1], [], []>} : vector<8x128xf32>, vector<128x128xf32>, vector<8x128xf32> -> vector<8x128xf32>
    %c0_24 = arith.constant 0 : index
    %c0_25 = arith.constant 0 : index
    %33 = vector.load %arg10[%c0_24, %c0_25] : memref<8x128xf32, #tpu.memory_space<vmem>>, vector<8x128xf32>
    %cst_26 = arith.constant dense<0.000000e+00> : vector<8x1xf32>
    %34 = tpu.matmul %33, %28, %cst_26 {dimension_numbers = #tpu.dot_dimension_numbers<[1], [0], [0], [1], [0, 0, 1, 1], [], []>} : vector<8x128xf32>, vector<128x1xf32>, vector<8x1xf32> -> vector<8x1xf32>
    %35 = tpu.reciprocal %34 {approx = true} : vector<8x1xf32> -> vector<8x1xf32>
    %36 = vector.broadcast %35 : vector<8x1xf32> to vector<8x128xf32>
    %37 = arith.mulf %32, %36 : vector<8x128xf32>
    %38 = arith.addf %37, %1 : vector<8x128xf32>
    %c0_27 = arith.constant 0 : index
    %c0_28 = arith.constant 0 : index
    %39 = vector.load %arg11[%c0_27, %c0_28] : memref<8x128xf32, #tpu.memory_space<vmem>>, vector<8x128xf32>
    tpu.vector_store %arg11[%c0_27, %c0_28], %38 {strides = array<i32>} : memref<8x128xf32, #tpu.memory_space<vmem>>, vector<8x128xf32>,
    return
  }
  func.func @transform_0(%arg0: i32) -> (i32, i32) {
    %c0_i32 = arith.constant 0 : i32
    %c0_i32_0 = arith.constant 0 : i32
    return %arg0, %c0_i32 : i32, i32
  }
  func.func @transform_1(%arg0: i32) -> (i32, i32) {
    %c0_i32 = arith.constant 0 : i32
    %c0_i32_0 = arith.constant 0 : i32
    return %arg0, %c0_i32 : i32, i32
  }
  func.func @transform_2(%arg0: i32) -> (i32, i32) {
    %c0_i32 = arith.constant 0 : i32
    %c0_i32_0 = arith.constant 0 : i32
    %c0_i32_1 = arith.constant 0 : i32
    return %c0_i32, %c0_i32_0 : i32, i32
  }
  func.func @transform_3(%arg0: i32) -> (i32, i32) {
    %c0_i32 = arith.constant 0 : i32
    %c0_i32_0 = arith.constant 0 : i32
    %c0_i32_1 = arith.constant 0 : i32
    return %c0_i32, %c0_i32_0 : i32, i32
  }
  func.func @transform_4(%arg0: i32) -> (i32, i32) {
    %c0_i32 = arith.constant 0 : i32
    %c0_i32_0 = arith.constant 0 : i32
    %c0_i32_1 = arith.constant 0 : i32
    return %c0_i32, %c0_i32_0 : i32, i32
  }
  func.func @transform_5(%arg0: i32) -> (i32, i32) {
    %c0_i32 = arith.constant 0 : i32
    %c0_i32_0 = arith.constant 0 : i32
    %c0_i32_1 = arith.constant 0 : i32
    return %c0_i32, %c0_i32_0 : i32, i32
  }
  func.func @transform_6(%arg0: i32) -> (i32, i32) {
    %c0_i32 = arith.constant 0 : i32
    %c0_i32_0 = arith.constant 0 : i32
    %c0_i32_1 = arith.constant 0 : i32
    return %c0_i32, %c0_i32_0 : i32, i32
  }
  func.func @transform_7(%arg0: i32) -> (i32, i32) {
    %c0_i32 = arith.constant 0 : i32
    %c0_i32_0 = arith.constant 0 : i32
    %c0_i32_1 = arith.constant 0 : i32
    return %c0_i32, %c0_i32_0 : i32, i32
  }
  func.func @transform_8(%arg0: i32) -> (i32, i32) {
    %c0_i32 = arith.constant 0 : i32
    %c0_i32_0 = arith.constant 0 : i32
    %c0_i32_1 = arith.constant 0 : i32
    return %c0_i32, %c0_i32_0 : i32, i32
  }
  func.func @transform_9(%arg0: i32) -> (i32, i32) {
    %c0_i32 = arith.constant 0 : i32
    %c0_i32_0 = arith.constant 0 : i32
    %c0_i32_1 = arith.constant 0 : i32
    return %c0_i32, %c0_i32_0 : i32, i32
  }
  func.func @transform_10(%arg0: i32) -> (i32, i32) {
    %c0_i32 = arith.constant 0 : i32
    %c0_i32_0 = arith.constant 0 : i32
    return %arg0, %c0_i32 : i32, i32
  }
}

</mosaic_0001>

<llo_original>
// kernel: tpu_custom_call.1
$region0: #{tpu_custom_call.1}
  #allocation0 [shape = 'u32[]', space=smem, size = 0x4, offset = 0x4, fixed_abs, tag = 'smem constant byte address 0x4 - core index']
  #allocation1 [shape = 'u32[144,128]{1,0:T(1,128)}', space=vmem, size = 0x12000, scoped, tag = 'internal scratch']
  #allocation2 [shape = 'f32[1,1]{1,0:T(1,128)S(1)}', space=vmem, size = 0x200, scoped, tag = 'scoped memory for tpu_custom_call.1']
  %s0 = inlined_call_operand.hbm [shape: f32[256,128], index: 0, kind: input, shape index: {}]
  %s1 = inlined_call_operand.vmem [shape: f32[16,128], index: 1, kind: input, shape index: {}]
  %s2 = inlined_call_operand.vmem [shape: f32[128,128], index: 2, kind: input, shape index: {}]
  %s3 = inlined_call_operand.vmem [shape: f32[1,128], index: 3, kind: input, shape index: {}]
  %s4 = inlined_call_operand.hbm [shape: f32[128,128], index: 4, kind: input, shape index: {}]
  %s5 = inlined_call_operand.vmem [shape: f32[1,128], index: 5, kind: input, shape index: {}]
  %s6 = inlined_call_operand.hbm [shape: f32[1,128], index: 6, kind: input, shape index: {}]
  %s7 = inlined_call_operand.<no memory space> [shape: f32[1,1], index: 7, kind: input, shape index: {}]
  %s8 = inlined_call_operand.vmem [shape: f32[128,8], index: 8, kind: input, shape index: {}]
  %s9 = inlined_call_operand.vmem [shape: f32[8,128], index: 9, kind: input, shape index: {}]
  %s10 = inlined_call_operand.hbm [shape: f32[16,128], index: 10, kind: output, shape index: {}]
  %s11 = sld [smem:[#allocation0]]
  $region85: #{tpu_custom_call.1} parent=0
    _
  %s13 = ssub.s32 1, %s11
  %s14 = scalar_select 0, %s13, %s11
  %v15 = vstv %s7
  %16 = vst [vmem:[#allocation2] sm:$0x1] %v15
  $region1: #{tpu_custom_call.1} parent=0
    #allocation3 [shape = 'u8[131072]{0}', space=vmem, size = 0x20000, scoped, tag = 'input window, operand 0']
    #allocation4 [shape = 's32[2]{0}', space=sflag, size = 0x8, scoped, tag = 'scoped memory for tpu_custom_call.1']
    #allocation5 [shape = 's32[2]{0}', space=sflag, size = 0x8, scoped, tag = 'scoped memory for tpu_custom_call.1']
    #allocation6 [shape = 'u8[65536]{0}', space=vmem, size = 0x10000, scoped, tag = 'input window, operand 4, single buffered']
    #allocation7 [shape = 's32[1]{0}', space=sflag, size = 0x4, scoped, tag = 'scoped memory for tpu_custom_call.1']
    #allocation8 [shape = 'u8[512]{0}', space=vmem, size = 0x400, scoped, tag = 'input window, operand 6, single buffered']
    #allocation9 [shape = 'u8[8192]{0}', space=vmem, size = 0x2000, scoped, tag = 'output window, operand 0']
    %17 = vsyncpa [#allocation4], 0
    %s18 = scalar_lea.sflag [#allocation4], 1
    %19 = vsyncpa %s18, 0
    %20 = vsyncpa [#allocation7], 0
    %21 = vsyncpa [#allocation5], 0
    %s22 = scalar_lea.sflag [#allocation5], 1
    %23 = vsyncpa %s22, 0
    loop: start=0, step=1, limit=4
    $region2: #{tpu_custom_call.1} parent=1 // loop_pre_header
      _
    $region3: #{tpu_custom_call.1} parent=1 // loop_header
      %s25 = sphi 0, %s29
      %p26 = scmp.ge.s32.totalorder %s25, 4
      %s35 = sphi 0, %s37
      %s38 = sphi 0, %s35
      %s39 = sphi 0, %s38
      %s55 = sphi 0, %s39
      %s61 = sphi 0, %s63
      %s64 = sphi 0, %s61
      %s65 = sphi 0, %s64
      %s81 = sphi 0, %s65
      %s85 = sphi 0, %s85
      %s87 = sphi 0, %s85
      %s88 = sphi 0, %s87
      %s102 = sphi 0, %s88
      %s106 = sphi 0, %s106
      %s108 = sphi 0, %s106
      %s109 = sphi 0, %s108
      %s123 = sphi 0, %s109
      %s127 = sphi 0, %s127
      %s129 = sphi 0, %s127
      %s130 = sphi 0, %s129
      %s144 = sphi 0, %s130
      %s148 = sphi 0, %s148
      %s150 = sphi 0, %s148
      %s151 = sphi 0, %s150
      %s165 = sphi 0, %s151
      %s169 = sphi 0, %s169
      %s171 = sphi 0, %s169
      %s172 = sphi 0, %s171
      %s186 = sphi 0, %s172
      %s190 = sphi 0, %s190
      %s192 = sphi 0, %s190
      %s193 = sphi 0, %s192
      %s207 = sphi 0, %s193
      %s211 = sphi 0, %s211
      %s213 = sphi 0, %s211
      %s214 = sphi 0, %s213
      %s228 = sphi 0, %s214
      %s232 = sphi 0, %s232
      %s234 = sphi 0, %s232
      %s235 = sphi 0, %s234
      %s249 = sphi 0, %s235
      %s255 = sphi 0, %s257
      %s258 = sphi 0, %s255
      %s259 = sphi 0, %s258
      %s275 = sphi 0, %s259
    $region4: #{tpu_custom_call.1} parent=1 // loop_header_branch
      %28 = sbr.rel (%p26) target = $region8
    $region5: #{tpu_custom_call.1} parent=1 // loop_body
      %s30 = ssub.s32 %s25, 1
      %s31 = ssub.s32 %s25, 2
      %s32 = sadd.s32 %s25, 1
      %s33 = ssub.s32 %s25, %s32
      %p34 = scmp.eq.s32.totalorder %s33, 0
      %s36 = sadd.s32 %s35, 1
      %s37 = scalar_select %p34, %s35, %s36
      %p40 = pneg %p34
      %p41 = scmp.eq.s32.totalorder %s25, 1
      %p42 = por %p40, %p41
      %p43 = scmp.ne.s32.totalorder %s35, %s38
      %p44 = scmp.eq.s32.totalorder %s25, 0
      %p45 = por %p43, %p44
      %p46 = scmp.ne.s32.totalorder %s35, %s38
      %p47 = scmp.eq.s32.totalorder %s30, 1
      %p48 = por %p46, %p47
      %p49 = scmp.ne.s32.totalorder %s38, %s39
      %p50 = scmp.eq.s32.totalorder %s30, 0
      %p51 = por %p49, %p50
      %p52 = scmp.ne.s32.totalorder %s38, %s39
      %p53 = scmp.eq.s32.totalorder %s31, 1
      %p54 = por %p52, %p53
      %p56 = scmp.ne.s32.totalorder %s39, %s55
      %p57 = scmp.eq.s32.totalorder %s31, 0
      %p58 = por %p56, %p57
      %s59 = ssub.s32 %s25, %s32
      %p60 = scmp.eq.s32.totalorder %s59, 0
      %s62 = sadd.s32 %s61, 1
      %s63 = scalar_select %p60, %s61, %s62
      %p66 = pneg %p60
      %p67 = scmp.eq.s32.totalorder %s25, 1
      %p68 = por %p66, %p67
      %p69 = scmp.ne.s32.totalorder %s61, %s64
      %p70 = scmp.eq.s32.totalorder %s25, 0
      %p71 = por %p69, %p70
      %p72 = scmp.ne.s32.totalorder %s61, %s64
      %p73 = scmp.eq.s32.totalorder %s30, 1
      %p74 = por %p72, %p73
      %p75 = scmp.ne.s32.totalorder %s64, %s65
      %p76 = scmp.eq.s32.totalorder %s30, 0
      %p77 = por %p75, %p76
      %p78 = scmp.ne.s32.totalorder %s64, %s65
      %p79 = scmp.eq.s32.totalorder %s31, 1
      %p80 = por %p78, %p79
      %p82 = scmp.ne.s32.totalorder %s65, %s81
      %p83 = scmp.eq.s32.totalorder %s31, 0
      %p84 = por %p82, %p83
      %s86 = sadd.s32 %s85, 1
      %p89 = scmp.eq.s32.totalorder %s25, 1
      %p90 = scmp.ne.s32.totalorder %s85, %s87
      %p91 = scmp.eq.s32.totalorder %s25, 0
      %p92 = por %p90, %p91
      %p93 = scmp.ne.s32.totalorder %s85, %s87
      %p94 = scmp.eq.s32.totalorder %s30, 1
      %p95 = por %p93, %p94
      %p96 = scmp.ne.s32.totalorder %s87, %s88
      %p97 = scmp.eq.s32.totalorder %s30, 0
      %p98 = por %p96, %p97
      %p99 = scmp.ne.s32.totalorder %s87, %s88
      %p100 = scmp.eq.s32.totalorder %s31, 1
      %p101 = por %p99, %p100
      %p103 = scmp.ne.s32.totalorder %s88, %s102
      %p104 = scmp.eq.s32.totalorder %s31, 0
      %p105 = por %p103, %p104
      %s107 = sadd.s32 %s106, 1
      %p110 = scmp.eq.s32.totalorder %s25, 1
      %p111 = scmp.ne.s32.totalorder %s106, %s108
      %p112 = scmp.eq.s32.totalorder %s25, 0
      %p113 = por %p111, %p112
      %p114 = scmp.ne.s32.totalorder %s106, %s108
      %p115 = scmp.eq.s32.totalorder %s30, 1
      %p116 = por %p114, %p115
      %p117 = scmp.ne.s32.totalorder %s108, %s109
      %p118 = scmp.eq.s32.totalorder %s30, 0
      %p119 = por %p117, %p118
      %p120 = scmp.ne.s32.totalorder %s108, %s109
      %p121 = scmp.eq.s32.totalorder %s31, 1
      %p122 = por %p120, %p121
      %p124 = scmp.ne.s32.totalorder %s109, %s123
      %p125 = scmp.eq.s32.totalorder %s31, 0
      %p126 = por %p124, %p125
      %s128 = sadd.s32 %s127, 1
      %p131 = scmp.eq.s32.totalorder %s25, 1
      %p132 = scmp.ne.s32.totalorder %s127, %s129
      %p133 = scmp.eq.s32.totalorder %s25, 0
      %p134 = por %p132, %p133
      %p135 = scmp.ne.s32.totalorder %s127, %s129
      %p136 = scmp.eq.s32.totalorder %s30, 1
      %p137 = por %p135, %p136
      %p138 = scmp.ne.s32.totalorder %s129, %s130
      %p139 = scmp.eq.s32.totalorder %s30, 0
      %p140 = por %p138, %p139
      %p141 = scmp.ne.s32.totalorder %s129, %s130
      %p142 = scmp.eq.s32.totalorder %s31, 1
      %p143 = por %p141, %p142
      %p145 = scmp.ne.s32.totalorder %s130, %s144
      %p146 = scmp.eq.s32.totalorder %s31, 0
      %p147 = por %p145, %p146
      %s149 = sadd.s32 %s148, 1
      %p152 = scmp.eq.s32.totalorder %s25, 1
      %p153 = scmp.ne.s32.totalorder %s148, %s150
      %p154 = scmp.eq.s32.totalorder %s25, 0
      %p155 = por %p153, %p154
      %p156 = scmp.ne.s32.totalorder %s148, %s150
      %p157 = scmp.eq.s32.totalorder %s30, 1
      %p158 = por %p156, %p157
      %p159 = scmp.ne.s32.totalorder %s150, %s151
      %p160 = scmp.eq.s32.totalorder %s30, 0
      %p161 = por %p159, %p160
      %p162 = scmp.ne.s32.totalorder %s150, %s151
      %p163 = scmp.eq.s32.totalorder %s31, 1
      %p164 = por %p162, %p163
      %p166 = scmp.ne.s32.totalorder %s151, %s165
      %p167 = scmp.eq.s32.totalorder %s31, 0
      %p168 = por %p166, %p167
      %s170 = sadd.s32 %s169, 1
      %p173 = scmp.eq.s32.totalorder %s25, 1
      %p174 = scmp.ne.s32.totalorder %s169, %s171
      %p175 = scmp.eq.s32.totalorder %s25, 0
      %p176 = por %p174, %p175
      %p177 = scmp.ne.s32.totalorder %s169, %s171
      %p178 = scmp.eq.s32.totalorder %s30, 1
      %p179 = por %p177, %p178
      %p180 = scmp.ne.s32.totalorder %s171, %s172
      %p181 = scmp.eq.s32.totalorder %s30, 0
      %p182 = por %p180, %p181
      %p183 = scmp.ne.s32.totalorder %s171, %s172
      %p184 = scmp.eq.s32.totalorder %s31, 1
      %p185 = por %p183, %p184
      %p187 = scmp.ne.s32.totalorder %s172, %s186
      %p188 = scmp.eq.s32.totalorder %s31, 0
      %p189 = por %p187, %p188
      %s191 = sadd.s32 %s190, 1
      %p194 = scmp.eq.s32.totalorder %s25, 1
      %p195 = scmp.ne.s32.totalorder %s190, %s192
      %p196 = scmp.eq.s32.totalorder %s25, 0
      %p197 = por %p195, %p196
      %p198 = scmp.ne.s32.totalorder %s190, %s192
      %p199 = scmp.eq.s32.totalorder %s30, 1
      %p200 = por %p198, %p199
      %p201 = scmp.ne.s32.totalorder %s192, %s193
      %p202 = scmp.eq.s32.totalorder %s30, 0
      %p203 = por %p201, %p202
      %p204 = scmp.ne.s32.totalorder %s192, %s193
      %p205 = scmp.eq.s32.totalorder %s31, 1
      %p206 = por %p204, %p205
      %p208 = scmp.ne.s32.totalorder %s193, %s207
      %p209 = scmp.eq.s32.totalorder %s31, 0
      %p210 = por %p208, %p209
      %s212 = sadd.s32 %s211, 1
      %p215 = scmp.eq.s32.totalorder %s25, 1
      %p216 = scmp.ne.s32.totalorder %s211, %s213
      %p217 = scmp.eq.s32.totalorder %s25, 0
      %p218 = por %p216, %p217
      %p219 = scmp.ne.s32.totalorder %s211, %s213
      %p220 = scmp.eq.s32.totalorder %s30, 1
      %p221 = por %p219, %p220
      %p222 = scmp.ne.s32.totalorder %s213, %s214
      %p223 = scmp.eq.s32.totalorder %s30, 0
      %p224 = por %p222, %p223
      %p225 = scmp.ne.s32.totalorder %s213, %s214
      %p226 = scmp.eq.s32.totalorder %s31, 1
      %p227 = por %p225, %p226
      %p229 = scmp.ne.s32.totalorder %s214, %s228
      %p230 = scmp.eq.s32.totalorder %s31, 0
      %p231 = por %p229, %p230
      %s233 = sadd.s32 %s232, 1
      %p236 = scmp.eq.s32.totalorder %s25, 1
      %p237 = scmp.ne.s32.totalorder %s232, %s234
      %p238 = scmp.eq.s32.totalorder %s25, 0
      %p239 = por %p237, %p238
      %p240 = scmp.ne.s32.totalorder %s232, %s234
      %p241 = scmp.eq.s32.totalorder %s30, 1
      %p242 = por %p240, %p241
      %p243 = scmp.ne.s32.totalorder %s234, %s235
      %p244 = scmp.eq.s32.totalorder %s30, 0
      %p245 = por %p243, %p244
      %p246 = scmp.ne.s32.totalorder %s234, %s235
      %p247 = scmp.eq.s32.totalorder %s31, 1
      %p248 = por %p246, %p247
      %p250 = scmp.ne.s32.totalorder %s235, %s249
      %p251 = scmp.eq.s32.totalorder %s31, 0
      %p252 = por %p250, %p251
      %s253 = ssub.s32 %s25, %s32
      %p254 = scmp.eq.s32.totalorder %s253, 0
      %s256 = sadd.s32 %s255, 1
      %s257 = scalar_select %p254, %s255, %s256
      %p260 = pneg %p254
      %p261 = scmp.eq.s32.totalorder %s25, 1
      %p262 = por %p260, %p261
      %p263 = scmp.ne.s32.totalorder %s255, %s258
      %p264 = scmp.eq.s32.totalorder %s25, 0
      %p265 = por %p263, %p264
      %p266 = scmp.ne.s32.totalorder %s255, %s258
      %p267 = scmp.eq.s32.totalorder %s30, 1
      %p268 = por %p266, %p267
      %p269 = scmp.ne.s32.totalorder %s258, %s259
      %p270 = scmp.eq.s32.totalorder %s30, 0
      %p271 = por %p269, %p270
      %p272 = scmp.ne.s32.totalorder %s258, %s259
      %p273 = scmp.eq.s32.totalorder %s31, 1
      %p274 = por %p272, %p273
      %p276 = scmp.ne.s32.totalorder %s259, %s275
      %p277 = scmp.eq.s32.totalorder %s31, 0
      %p278 = por %p276, %p277
      %p279 = scmp.le.s32.totalorder 1, %s25
      %p280 = scmp.lt.s32.totalorder %s25, 3
      %p281 = pnand %p279, %p280
      %p282 = pneg %p281
      // Predicated region
      $region9: #{tpu_custom_call.1} parent=5 // pred_check
        _
      $region10: #{tpu_custom_call.1} parent=5 // pred_check_branch
        %284 = sbr.rel (%p281) target = $region12
      $region11: #{tpu_custom_call.1} parent=5 // pred_region
        %s285 = ssub.s32 %s25, 1
        // Predicated region
        $region13: #{tpu_custom_call.1} parent=11 // pred_check
          %p286 = pneg %p98
        $region14: #{tpu_custom_call.1} parent=11 // pred_check_branch
          %288 = sbr.rel (%p286) target = $region16
        $region15: #{tpu_custom_call.1} parent=11 // pred_region
          _
        $region16: #{tpu_custom_call.1} parent=11 // pred_fallthru
          _
        // Predicated region
        $region17: #{tpu_custom_call.1} parent=11 // pred_check
          %p289 = pneg %p119
        $region18: #{tpu_custom_call.1} parent=11 // pred_check_branch
          %291 = sbr.rel (%p289) target = $region20
        $region19: #{tpu_custom_call.1} parent=11 // pred_region
          _
        $region20: #{tpu_custom_call.1} parent=11 // pred_fallthru
          _
        // Predicated region
        $region21: #{tpu_custom_call.1} parent=11 // pred_check
          %p292 = pneg %p140
        $region22: #{tpu_custom_call.1} parent=11 // pred_check_branch
          %294 = sbr.rel (%p292) target = $region24
        $region23: #{tpu_custom_call.1} parent=11 // pred_region
          %s296 = ssub.s32 2048, 2048
          %297 = vsyncadd [#allocation7], %s296
          %s298 = sshll.u32 [#allocation6], 4
          %s299 = int_to_ptr.vmem [resolvable:$true] %s298
          %304 = dma.hbm_to_vmem [thread:$0]  %s4, 2048, %s299, [#allocation7], 128, 128, 8
        $region24: #{tpu_custom_call.1} parent=11 // pred_fallthru
          _
        // Predicated region
        $region25: #{tpu_custom_call.1} parent=11 // pred_check
          %p305 = pneg %p161
        $region26: #{tpu_custom_call.1} parent=11 // pred_check_branch
          %307 = sbr.rel (%p305) target = $region28
        $region27: #{tpu_custom_call.1} parent=11 // pred_region
          _
        $region28: #{tpu_custom_call.1} parent=11 // pred_fallthru
          _
        // Predicated region
        $region29: #{tpu_custom_call.1} parent=11 // pred_check
          %p308 = pneg %p182
        $region30: #{tpu_custom_call.1} parent=11 // pred_check_branch
          %310 = sbr.rel (%p308) target = $region32
        $region31: #{tpu_custom_call.1} parent=11 // pred_region
          %s312 = ssub.s32 16, 16
          %313 = vsyncadd [#allocation7], %s312
          %s315 = sshll.u32 [#allocation8], 4
          %s316 = int_to_ptr.vmem [resolvable:$true] %s315
          %318 = dma.hbm_to_vmem [thread:$0]  %s6, 16, %s316, [#allocation7]
        $region32: #{tpu_custom_call.1} parent=11 // pred_fallthru
          _
        // Predicated region
        $region33: #{tpu_custom_call.1} parent=11 // pred_check
          %p319 = pneg %p203
        $region34: #{tpu_custom_call.1} parent=11 // pred_check_branch
          %321 = sbr.rel (%p319) target = $region36
        $region35: #{tpu_custom_call.1} parent=11 // pred_region
          _
        $region36: #{tpu_custom_call.1} parent=11 // pred_fallthru
          _
        // Predicated region
        $region37: #{tpu_custom_call.1} parent=11 // pred_check
          %p322 = pneg %p224
        $region38: #{tpu_custom_call.1} parent=11 // pred_check_branch
          %324 = sbr.rel (%p322) target = $region40
        $region39: #{tpu_custom_call.1} parent=11 // pred_region
          _
        $region40: #{tpu_custom_call.1} parent=11 // pred_fallthru
          _
        // Predicated region
        $region41: #{tpu_custom_call.1} parent=11 // pred_check
          %p325 = pneg %p245
        $region42: #{tpu_custom_call.1} parent=11 // pred_check_branch
          %327 = sbr.rel (%p325) target = $region44
        $region43: #{tpu_custom_call.1} parent=11 // pred_region
          _
        $region44: #{tpu_custom_call.1} parent=11 // pred_fallthru
          _
      $region12: #{tpu_custom_call.1} parent=5 // pred_fallthru
        _
      %p328 = scmp.lt.s32.totalorder %s25, 2
      // Predicated region
      $region45: #{tpu_custom_call.1} parent=5 // pred_check
        %p329 = pneg %p328
      $region46: #{tpu_custom_call.1} parent=5 // pred_check_branch
        %331 = sbr.rel (%p329) target = $region48
      $region47: #{tpu_custom_call.1} parent=5 // pred_region
        // Predicated region
        $region49: #{tpu_custom_call.1} parent=47 // pred_check
          %p332 = pneg %p45
        $region50: #{tpu_custom_call.1} parent=47 // pred_check_branch
          %334 = sbr.rel (%p332) target = $region52
        $region51: #{tpu_custom_call.1} parent=47 // pred_region
          %s335 = sand.u32 %s35, 1
          %s336 = scalar_lea.sflag [#allocation4], %s335
          %s337 = sand.u32 %s35, 1
          %s338 = smul.addr %s337, 128
          %s339 = scalar_lea.vmem [#allocation3], %s338
          %s340 = smul.u32 16, %s25
          %s342 = ssub.s32 2048, 2048
          %343 = vsyncadd %s336, %s342
          %s344 = smul.addr %s340, 128
          %s345 = scalar_lea.hbm %s0, %s344
          %s346 = sshll.u32 %s339, 4
          %s347 = int_to_ptr.vmem [resolvable:$true] %s346
          %352 = dma.hbm_to_vmem [thread:$0]  %s345, 2048, %s347, %s336, 128, 128, 8
        $region52: #{tpu_custom_call.1} parent=47 // pred_fallthru
          _
        // Predicated region
        $region53: #{tpu_custom_call.1} parent=47 // pred_check
          %p353 = pneg %p71
        $region54: #{tpu_custom_call.1} parent=47 // pred_check_branch
          %355 = sbr.rel (%p353) target = $region56
        $region55: #{tpu_custom_call.1} parent=47 // pred_region
          %p356 = scmp.lt.s32.totalorder %s25, 1
          %s357 = scalar_select %p356, %s25, 1
          %s358 = smul.addr %s357, 8
          %s359 = scalar_lea.vmem %s1, %s358
        $region56: #{tpu_custom_call.1} parent=47 // pred_fallthru
          _
      $region48: #{tpu_custom_call.1} parent=5 // pred_fallthru
        _
      %p360 = scmp.le.s32.totalorder 1, %s25
      %p361 = scmp.lt.s32.totalorder %s25, 3
      %p362 = pnand %p360, %p361
      %p363 = pneg %p362
      // Predicated region
      $region57: #{tpu_custom_call.1} parent=5 // pred_check
        _
      $region58: #{tpu_custom_call.1} parent=5 // pred_check_branch
        %365 = sbr.rel (%p362) target = $region60
      $region59: #{tpu_custom_call.1} parent=5 // pred_region
        %s366 = ssub.s32 %s25, 1
        %s367 = sand.u32 %s38, 1
        %s368 = scalar_lea.sflag [#allocation4], %s367
        %s369 = sand.u32 %s38, 1
        %s370 = smul.addr %s369, 128
        %s371 = scalar_lea.vmem [#allocation3], %s370
        // Predicated region
        $region61: #{tpu_custom_call.1} parent=59 // pred_check
          %p372 = pneg %p51
        $region62: #{tpu_custom_call.1} parent=59 // pred_check_branch
          %374 = sbr.rel (%p372) target = $region64
        $region63: #{tpu_custom_call.1} parent=59 // pred_region
          %375 = dma.done %s368, 2048
        $region64: #{tpu_custom_call.1} parent=59 // pred_fallthru
          _
        // Predicated region
        $region65: #{tpu_custom_call.1} parent=59 // pred_check
          %p376 = pneg %p140
        $region66: #{tpu_custom_call.1} parent=59 // pred_check_branch
          %378 = sbr.rel (%p376) target = $region68
        $region67: #{tpu_custom_call.1} parent=59 // pred_region
          %379 = dma.done [#allocation7], 2048
        $region68: #{tpu_custom_call.1} parent=59 // pred_fallthru
          _
        // Predicated region
        $region69: #{tpu_custom_call.1} parent=59 // pred_check
          %p380 = pneg %p182
        $region70: #{tpu_custom_call.1} parent=59 // pred_check_branch
          %382 = sbr.rel (%p380) target = $region72
        $region71: #{tpu_custom_call.1} parent=59 // pred_region
          %383 = dma.done [#allocation7], 16
        $region72: #{tpu_custom_call.1} parent=59 // pred_fallthru
          _
        %s384 = sand.u32 %s38, 1
        %s385 = scalar_lea.sflag [#allocation4], %s384
        %s386 = sand.u32 %s38, 1
        %s387 = smul.addr %s386, 128
        %s388 = scalar_lea.vmem [#allocation3], %s387
        %p389 = pneg %p51
        %p390 = pneg %p48
        %p391 = scmp.lt.s32.totalorder %s30, 1
        %s392 = scalar_select %p391, %s30, 1
        %s393 = smul.addr %s392, 8
        %s394 = scalar_lea.vmem %s1, %s393
        %p395 = pneg %p77
        %p396 = pneg %p74
        %p397 = pneg %p98
        %p398 = pneg %p95
        %p399 = pneg %p119
        %p400 = pneg %p116
        %p401 = pneg %p140
        %p402 = pneg %p137
        %p403 = pneg %p161
        %p404 = pneg %p158
        %p405 = pneg %p182
        %p406 = pneg %p179
        %p407 = pneg %p203
        %p408 = pneg %p200
        %p409 = pneg %p224
        %p410 = pneg %p221
        %p411 = pneg %p245
        %p412 = pneg %p242
        %p413 = pneg %p271
        %p414 = pneg %p268
        %s415 = sand.u32 %s258, 1
        %s416 = scalar_lea.sflag [#allocation5], %s415
        %s417 = sand.u32 %s258, 1
        %s418 = smul.addr %s417, 8
        %s419 = scalar_lea.vmem [#allocation9], %s418
        %s420 = smul.u32 16, %s30
        %p421 = scmp.lt.s32.totalorder %s30, 1
        %s422 = scalar_select %p421, %s30, 1
        %s423 = smul.addr %s422, 8
        %s424 = scalar_lea.vmem %s1, %s423
        %v425 = vld [vmem:[%s371] sm:$0xff]
        %v426 = vld [vmem:[%s371 + $0x8] sm:$0xff]
        %v427 = vld [vmem:[%s371 + $0x10] sm:$0xff]
        %v428 = vld [vmem:[%s371 + $0x18] sm:$0xff]
        %v429 = vld [vmem:[%s371 + $0x20] sm:$0xff]
        %v430 = vld [vmem:[%s371 + $0x28] sm:$0xff]
        %v431 = vld [vmem:[%s371 + $0x30] sm:$0xff]
        %v432 = vld [vmem:[%s371 + $0x38] sm:$0xff]
        %v433 = vld [vmem:[%s371 + $0x40] sm:$0xff]
        %v434 = vld [vmem:[%s371 + $0x48] sm:$0xff]
        %v435 = vld [vmem:[%s371 + $0x50] sm:$0xff]
        %v436 = vld [vmem:[%s371 + $0x58] sm:$0xff]
        %v437 = vld [vmem:[%s371 + $0x60] sm:$0xff]
        %v438 = vld [vmem:[%s371 + $0x68] sm:$0xff]
        %v439 = vld [vmem:[%s371 + $0x70] sm:$0xff]
        %v440 = vld [vmem:[%s371 + $0x78] sm:$0xff]
        %v441 = vld [vmem:[%s424] sm:$0xff]
        %v442 = vld [vmem:[%s2] sm:$0xff]
        %v443 = vld [vmem:[%s2 + $0x8] sm:$0xff]
        %v444 = vld [vmem:[%s2 + $0x10] sm:$0xff]
        %v445 = vld [vmem:[%s2 + $0x18] sm:$0xff]
        %v446 = vld [vmem:[%s2 + $0x20] sm:$0xff]
        %v447 = vld [vmem:[%s2 + $0x28] sm:$0xff]
        %v448 = vld [vmem:[%s2 + $0x30] sm:$0xff]
        %v449 = vld [vmem:[%s2 + $0x38] sm:$0xff]
        %v450 = vld [vmem:[%s2 + $0x40] sm:$0xff]
        %v451 = vld [vmem:[%s2 + $0x48] sm:$0xff]
        %v452 = vld [vmem:[%s2 + $0x50] sm:$0xff]
        %v453 = vld [vmem:[%s2 + $0x58] sm:$0xff]
        %v454 = vld [vmem:[%s2 + $0x60] sm:$0xff]
        %v455 = vld [vmem:[%s2 + $0x68] sm:$0xff]
        %v456 = vld [vmem:[%s2 + $0x70] sm:$0xff]
        %v457 = vld [vmem:[%s2 + $0x78] sm:$0xff]
        %v458 = vld [vmem:[%s3] sm:$0x1]
        %v460 = vlaneseq
        %v461 = vshrl.u32 %v460, 7
        %v462 = vsub.s32 0, %v461
        %v463 = vrot.slane %v458, %v462
        %465 = vmatprep.subr.mxu0 0.0
        %466 = vmatpush1.msra.mxu0 %v442
        %467 = vmatprep.subr.mxu0 0.0
        %468 = vmatpush1.msra.mxu0 %v443
        %469 = vmatprep.subr.mxu0 0.0
        %470 = vmatpush1.msra.mxu0 %v444
        %471 = vmatprep.subr.mxu0 0.0
        %472 = vmatpush1.msra.mxu0 %v445
        %473 = vmatprep.subr.mxu0 0.0
        %474 = vmatpush1.msra.mxu0 %v446
        %475 = vmatprep.subr.mxu0 0.0
        %476 = vmatpush1.msra.mxu0 %v447
        %477 = vmatprep.subr.mxu0 0.0
        %478 = vmatpush1.msra.mxu0 %v448
        %479 = vmatprep.subr.mxu0 0.0
        %480 = vmatpush1.msra.mxu0 %v449
        %481 = vmatprep.subr.mxu0 0.0
        %482 = vmatpush1.msra.mxu0 %v450
        %483 = vmatprep.subr.mxu0 0.0
        %484 = vmatpush1.msra.mxu0 %v451
        %485 = vmatprep.subr.mxu0 0.0
        %486 = vmatpush1.msra.mxu0 %v452
        %487 = vmatprep.subr.mxu0 0.0
        %488 = vmatpush1.msra.mxu0 %v453
        %489 = vmatprep.subr.mxu0 0.0
        %490 = vmatpush1.msra.mxu0 %v454
        %491 = vmatprep.subr.mxu0 0.0
        %492 = vmatpush1.msra.mxu0 %v455
        %493 = vmatprep.subr.mxu0 0.0
        %494 = vmatpush1.msra.mxu0 %v456
        %495 = vmatprep.subr.mxu0 0.0
        %496 = vmatpush1.msra.mxu0 %v457
        %497 = vmatprep.subr.mxu0 0.0
        %498 = vmatpush1.msra.mxu0 0.0
        %499 = vmatprep.subr.mxu0 0.0
        %500 = vmatpush1.msra.mxu0 0.0
        %501 = vmatprep.subr.mxu0 0.0
        %502 = vmatpush1.msra.mxu0 0.0
        %503 = vmatprep.subr.mxu0 0.0
        %504 = vmatpush1.msra.mxu0 0.0
        %505 = vmatprep.subr.mxu0 0.0
        %506 = vmatpush1.msra.mxu0 0.0
        %507 = vmatprep.subr.mxu0 0.0
        %508 = vmatpush1.msra.mxu0 0.0
        %509 = vmatprep.subr.mxu0 0.0
        %510 = vmatpush1.msra.mxu0 0.0
        %511 = vmatprep.subr.mxu0 0.0
        %512 = vmatpush1.msra.mxu0 0.0
        %513 = vmatprep.subr.mxu0 0.0
        %514 = vmatpush1.msra.mxu0 0.0
        %515 = vmatprep.subr.mxu0 0.0
        %516 = vmatpush1.msra.mxu0 0.0
        %517 = vmatprep.subr.mxu0 0.0
        %518 = vmatpush1.msra.mxu0 0.0
        %519 = vmatprep.subr.mxu0 0.0
        %520 = vmatpush1.msra.mxu0 0.0
        %521 = vmatprep.subr.mxu0 0.0
        %522 = vmatpush1.msra.mxu0 0.0
        %523 = vmatprep.subr.mxu0 0.0
        %524 = vmatpush1.msra.mxu0 0.0
        %525 = vmatprep.subr.mxu0 0.0
        %526 = vmatpush1.msra.mxu0 0.0
        %527 = vmatprep.subr.mxu0 0.0
        %528 = vmatpush1.msra.mxu0 0.0
        %529 = vmatprep.mubr.f32.mxu0 0.0
        %530 = vmatmul.mubr.f32.gmra.mrb[0].mxu0 %v425
        %v531 = vpop.f32.mrb[0].mxu0
        %v532 = vadd.f32 %v463, %v531
        %v533 = vpop.f32.mrb[0].mxu0
        %534 = vmatprep.mubr.f32.mxu0 0.0
        %535 = vmatmul.mubr.f32.gmra.mrb[0].mxu0 %v426
        %v536 = vpop.f32.mrb[0].mxu0
        %v537 = vadd.f32 %v463, %v536
        %v538 = vpop.f32.mrb[0].mxu0
        %539 = vmatprep.mubr.f32.mxu0 0.0
        %540 = vmatmul.mubr.f32.gmra.mrb[0].mxu0 %v427
        %v541 = vpop.f32.mrb[0].mxu0
        %v542 = vadd.f32 %v463, %v541
        %v543 = vpop.f32.mrb[0].mxu0
        %544 = vmatprep.mubr.f32.mxu0 0.0
        %545 = vmatmul.mubr.f32.gmra.mrb[0].mxu0 %v428
        %v546 = vpop.f32.mrb[0].mxu0
        %v547 = vadd.f32 %v463, %v546
        %v548 = vpop.f32.mrb[0].mxu0
        %549 = vmatprep.mubr.f32.mxu0 0.0
        %550 = vmatmul.mubr.f32.gmra.mrb[0].mxu0 %v429
        %v551 = vpop.f32.mrb[0].mxu0
        %v552 = vadd.f32 %v463, %v551
        %v553 = vpop.f32.mrb[0].mxu0
        %554 = vmatprep.mubr.f32.mxu0 0.0
        %555 = vmatmul.mubr.f32.gmra.mrb[0].mxu0 %v430
        %v556 = vpop.f32.mrb[0].mxu0
        %v557 = vadd.f32 %v463, %v556
        %v558 = vpop.f32.mrb[0].mxu0
        %559 = vmatprep.mubr.f32.mxu0 0.0
        %560 = vmatmul.mubr.f32.gmra.mrb[0].mxu0 %v431
        %v561 = vpop.f32.mrb[0].mxu0
        %v562 = vadd.f32 %v463, %v561
        %v563 = vpop.f32.mrb[0].mxu0
        %564 = vmatprep.mubr.f32.mxu0 0.0
        %565 = vmatmul.mubr.f32.gmra.mrb[0].mxu0 %v432
        %v566 = vpop.f32.mrb[0].mxu0
        %v567 = vadd.f32 %v463, %v566
        %v568 = vpop.f32.mrb[0].mxu0
        %569 = vmatprep.mubr.f32.mxu0 0.0
        %570 = vmatmul.mubr.f32.gmra.mrb[0].mxu0 %v433
        %v571 = vpop.f32.mrb[0].mxu0
        %v572 = vadd.f32 %v463, %v571
        %v573 = vpop.f32.mrb[0].mxu0
        %574 = vmatprep.mubr.f32.mxu0 0.0
        %575 = vmatmul.mubr.f32.gmra.mrb[0].mxu0 %v434
        %v576 = vpop.f32.mrb[0].mxu0
        %v577 = vadd.f32 %v463, %v576
        %v578 = vpop.f32.mrb[0].mxu0
        %579 = vmatprep.mubr.f32.mxu0 0.0
        %580 = vmatmul.mubr.f32.gmra.mrb[0].mxu0 %v435
        %v581 = vpop.f32.mrb[0].mxu0
        %v582 = vadd.f32 %v463, %v581
        %v583 = vpop.f32.mrb[0].mxu0
        %584 = vmatprep.mubr.f32.mxu0 0.0
        %585 = vmatmul.mubr.f32.gmra.mrb[0].mxu0 %v436
        %v586 = vpop.f32.mrb[0].mxu0
        %v587 = vadd.f32 %v463, %v586
        %v588 = vpop.f32.mrb[0].mxu0
        %589 = vmatprep.mubr.f32.mxu0 0.0
        %590 = vmatmul.mubr.f32.gmra.mrb[0].mxu0 %v437
        %v591 = vpop.f32.mrb[0].mxu0
        %v592 = vadd.f32 %v463, %v591
        %v593 = vpop.f32.mrb[0].mxu0
        %594 = vmatprep.mubr.f32.mxu0 0.0
        %595 = vmatmul.mubr.f32.gmra.mrb[0].mxu0 %v438
        %v596 = vpop.f32.mrb[0].mxu0
        %v597 = vadd.f32 %v463, %v596
        %v598 = vpop.f32.mrb[0].mxu0
        %599 = vmatprep.mubr.f32.mxu0 0.0
        %600 = vmatmul.mubr.f32.gmra.mrb[0].mxu0 %v439
        %v601 = vpop.f32.mrb[0].mxu0
        %v602 = vadd.f32 %v463, %v601
        %v603 = vpop.f32.mrb[0].mxu0
        %604 = vmatprep.mubr.f32.mxu0 0.0
        %605 = vmatmul.mubr.f32.gmra.mrb[0].mxu0 %v440
        %v606 = vpop.f32.mrb[0].mxu0
        %v607 = vadd.f32 %v463, %v606
        %v608 = vpop.f32.mrb[0].mxu0
        %609 = vdwg.mxu0
        %v610 = vld [vmem:[#allocation6] sm:$0xff]
        %v611 = vld [vmem:[#allocation6 + $0x8] sm:$0xff]
        %v612 = vld [vmem:[#allocation6 + $0x10] sm:$0xff]
        %v613 = vld [vmem:[#allocation6 + $0x18] sm:$0xff]
        %v614 = vld [vmem:[#allocation6 + $0x20] sm:$0xff]
        %v615 = vld [vmem:[#allocation6 + $0x28] sm:$0xff]
        %v616 = vld [vmem:[#allocation6 + $0x30] sm:$0xff]
        %v617 = vld [vmem:[#allocation6 + $0x38] sm:$0xff]
        %v618 = vld [vmem:[#allocation6 + $0x40] sm:$0xff]
        %v619 = vld [vmem:[#allocation6 + $0x48] sm:$0xff]
        %v620 = vld [vmem:[#allocation6 + $0x50] sm:$0xff]
        %v621 = vld [vmem:[#allocation6 + $0x58] sm:$0xff]
        %v622 = vld [vmem:[#allocation6 + $0x60] sm:$0xff]
        %v623 = vld [vmem:[#allocation6 + $0x68] sm:$0xff]
        %v624 = vld [vmem:[#allocation6 + $0x70] sm:$0xff]
        %v625 = vld [vmem:[#allocation6 + $0x78] sm:$0xff]
        %v626 = vld [vmem:[%s5] sm:$0x1]
        %v628 = vlaneseq
        %v629 = vshrl.u32 %v628, 7
        %v630 = vsub.s32 0, %v629
        %v631 = vrot.slane %v626, %v630
        %633 = vmatprep.subr.mxu0 0.0
        %634 = vmatpush1.msra.mxu0 %v610
        %635 = vmatprep.subr.mxu0 0.0
        %636 = vmatpush1.msra.mxu0 %v611
        %637 = vmatprep.subr.mxu0 0.0
        %638 = vmatpush1.msra.mxu0 %v612
        %639 = vmatprep.subr.mxu0 0.0
        %640 = vmatpush1.msra.mxu0 %v613
        %641 = vmatprep.subr.mxu0 0.0
        %642 = vmatpush1.msra.mxu0 %v614
        %643 = vmatprep.subr.mxu0 0.0
        %644 = vmatpush1.msra.mxu0 %v615
        %645 = vmatprep.subr.mxu0 0.0
        %646 = vmatpush1.msra.mxu0 %v616
        %647 = vmatprep.subr.mxu0 0.0
        %648 = vmatpush1.msra.mxu0 %v617
        %649 = vmatprep.subr.mxu0 0.0
        %650 = vmatpush1.msra.mxu0 %v618
        %651 = vmatprep.subr.mxu0 0.0
        %652 = vmatpush1.msra.mxu0 %v619
        %653 = vmatprep.subr.mxu0 0.0
        %654 = vmatpush1.msra.mxu0 %v620
        %655 = vmatprep.subr.mxu0 0.0
        %656 = vmatpush1.msra.mxu0 %v621
        %657 = vmatprep.subr.mxu0 0.0
        %658 = vmatpush1.msra.mxu0 %v622
        %659 = vmatprep.subr.mxu0 0.0
        %660 = vmatpush1.msra.mxu0 %v623
        %661 = vmatprep.subr.mxu0 0.0
        %662 = vmatpush1.msra.mxu0 %v624
        %663 = vmatprep.subr.mxu0 0.0
        %664 = vmatpush1.msra.mxu0 %v625
        %665 = vmatprep.subr.mxu0 0.0
        %666 = vmatpush1.msra.mxu0 0.0
        %667 = vmatprep.subr.mxu0 0.0
        %668 = vmatpush1.msra.mxu0 0.0
        %669 = vmatprep.subr.mxu0 0.0
        %670 = vmatpush1.msra.mxu0 0.0
        %671 = vmatprep.subr.mxu0 0.0
        %672 = vmatpush1.msra.mxu0 0.0
        %673 = vmatprep.subr.mxu0 0.0
        %674 = vmatpush1.msra.mxu0 0.0
        %675 = vmatprep.subr.mxu0 0.0
        %676 = vmatpush1.msra.mxu0 0.0
        %677 = vmatprep.subr.mxu0 0.0
        %678 = vmatpush1.msra.mxu0 0.0
        %679 = vmatprep.subr.mxu0 0.0
        %680 = vmatpush1.msra.mxu0 0.0
        %681 = vmatprep.subr.mxu0 0.0
        %682 = vmatpush1.msra.mxu0 0.0
        %683 = vmatprep.subr.mxu0 0.0
        %684 = vmatpush1.msra.mxu0 0.0
        %685 = vmatprep.subr.mxu0 0.0
        %686 = vmatpush1.msra.mxu0 0.0
        %687 = vmatprep.subr.mxu0 0.0
        %688 = vmatpush1.msra.mxu0 0.0
        %689 = vmatprep.subr.mxu0 0.0
        %690 = vmatpush1.msra.mxu0 0.0
        %691 = vmatprep.subr.mxu0 0.0
        %692 = vmatpush1.msra.mxu0 0.0
        %693 = vmatprep.subr.mxu0 0.0
        %694 = vmatpush1.msra.mxu0 0.0
        %695 = vmatprep.subr.mxu0 0.0
        %696 = vmatpush1.msra.mxu0 0.0
        %697 = vmatprep.mubr.f32.mxu0 0.0
        %698 = vmatmul.mubr.f32.gmra.mrb[0].mxu0 %v441
        %v699 = vpop.f32.mrb[0].mxu0
        %v700 = vadd.f32 %v631, %v699
        %v701 = vpop.f32.mrb[0].mxu0
        %702 = vdwg.mxu0
        %v703 = vld [vmem:[%s8] sm:$0xff]
        %v704 = vld [vmem:[%s8 + $0x8] sm:$0xff]
        %v705 = vld [vmem:[%s8 + $0x10] sm:$0xff]
        %v706 = vld [vmem:[%s8 + $0x18] sm:$0xff]
        %v707 = vld [vmem:[%s8 + $0x20] sm:$0xff]
        %v708 = vld [vmem:[%s8 + $0x28] sm:$0xff]
        %v709 = vld [vmem:[%s8 + $0x30] sm:$0xff]
        %v710 = vld [vmem:[%s8 + $0x38] sm:$0xff]
        %v711 = vld [vmem:[%s8 + $0x40] sm:$0xff]
        %v712 = vld [vmem:[%s8 + $0x48] sm:$0xff]
        %v713 = vld [vmem:[%s8 + $0x50] sm:$0xff]
        %v714 = vld [vmem:[%s8 + $0x58] sm:$0xff]
        %v715 = vld [vmem:[%s8 + $0x60] sm:$0xff]
        %v716 = vld [vmem:[%s8 + $0x68] sm:$0xff]
        %v717 = vld [vmem:[%s8 + $0x70] sm:$0xff]
        %v718 = vld [vmem:[%s8 + $0x78] sm:$0xff]
        %vm719 = vcmask 64512
        %v721 = vsel %vm719, %v703, 0
        %v724 = vsel %vm719, %v704, 0
        %v727 = vsel %vm719, %v705, 0
        %v730 = vsel %vm719, %v706, 0
        %v733 = vsel %vm719, %v707, 0
        %v736 = vsel %vm719, %v708, 0
        %v739 = vsel %vm719, %v709, 0
        %v742 = vsel %vm719, %v710, 0
        %v745 = vsel %vm719, %v711, 0
        %v748 = vsel %vm719, %v712, 0
        %v751 = vsel %vm719, %v713, 0
        %v754 = vsel %vm719, %v714, 0
        %v757 = vsel %vm719, %v715, 0
        %v760 = vsel %vm719, %v716, 0
        %v763 = vsel %vm719, %v717, 0
        %v766 = vsel %vm719, %v718, 0
        %768 = vmatprep.subr.mxu0 0.0
        %769 = vmatpush1.msra.mxu0 %v700
        %770 = vmatprep.subr.mxu0 0.0
        %771 = vmatpush1.msra.mxu0 0.0
        %772 = vmatprep.subr.mxu0 0.0
        %773 = vmatpush1.msra.mxu0 0.0
        %774 = vmatprep.subr.mxu0 0.0
        %775 = vmatpush1.msra.mxu0 0.0
        %776 = vmatprep.subr.mxu0 0.0
        %777 = vmatpush1.msra.mxu0 0.0
        %778 = vmatprep.subr.mxu0 0.0
        %779 = vmatpush1.msra.mxu0 0.0
        %780 = vmatprep.subr.mxu0 0.0
        %781 = vmatpush1.msra.mxu0 0.0
        %782 = vmatprep.subr.mxu0 0.0
        %783 = vmatpush1.msra.mxu0 0.0
        %784 = vmatprep.subr.mxu0 0.0
        %785 = vmatpush1.msra.mxu0 0.0
        %786 = vmatprep.subr.mxu0 0.0
        %787 = vmatpush1.msra.mxu0 0.0
        %788 = vmatprep.subr.mxu0 0.0
        %789 = vmatpush1.msra.mxu0 0.0
        %790 = vmatprep.subr.mxu0 0.0
        %791 = vmatpush1.msra.mxu0 0.0
        %792 = vmatprep.subr.mxu0 0.0
        %793 = vmatpush1.msra.mxu0 0.0
        %794 = vmatprep.subr.mxu0 0.0
        %795 = vmatpush1.msra.mxu0 0.0
        %796 = vmatprep.subr.mxu0 0.0
        %797 = vmatpush1.msra.mxu0 0.0
        %798 = vmatprep.subr.mxu0 0.0
        %799 = vmatpush1.msra.mxu0 0.0
        %800 = vmatprep.subr.mxu0 0.0
        %801 = vmatpush1.msra.mxu0 0.0
        %802 = vmatprep.subr.mxu0 0.0
        %803 = vmatpush1.msra.mxu0 0.0
        %804 = vmatprep.subr.mxu0 0.0
        %805 = vmatpush1.msra.mxu0 0.0
        %806 = vmatprep.subr.mxu0 0.0
        %807 = vmatpush1.msra.mxu0 0.0
        %808 = vmatprep.subr.mxu0 0.0
        %809 = vmatpush1.msra.mxu0 0.0
        %810 = vmatprep.subr.mxu0 0.0
        %811 = vmatpush1.msra.mxu0 0.0
        %812 = vmatprep.subr.mxu0 0.0
        %813 = vmatpush1.msra.mxu0 0.0
        %814 = vmatprep.subr.mxu0 0.0
        %815 = vmatpush1.msra.mxu0 0.0
        %816 = vmatprep.subr.mxu0 0.0
        %817 = vmatpush1.msra.mxu0 0.0
        %818 = vmatprep.subr.mxu0 0.0
        %819 = vmatpush1.msra.mxu0 0.0
        %820 = vmatprep.subr.mxu0 0.0
        %821 = vmatpush1.msra.mxu0 0.0
        %822 = vmatprep.subr.mxu0 0.0
        %823 = vmatpush1.msra.mxu0 0.0
        %824 = vmatprep.subr.mxu0 0.0
        %825 = vmatpush1.msra.mxu0 0.0
        %826 = vmatprep.subr.mxu0 0.0
        %827 = vmatpush1.msra.mxu0 0.0
        %828 = vmatprep.subr.mxu0 0.0
        %829 = vmatpush1.msra.mxu0 0.0
        %830 = vmatprep.subr.mxu0 0.0
        %831 = vmatpush1.msra.mxu0 0.0
        %832 = vmatprep.mubr.f32.mxu0 0.0
        %833 = vmatmul.mubr.f32.gmra.mrb[0].mxu0 %v721
        %v834 = vpop.f32.mrb[0].mxu0
        %v835 = vadd.f32 0.0, %v834
        %v836 = vpop.f32.mrb[0].mxu0
        %837 = vmatprep.mubr.f32.mxu0 0.0
        %838 = vmatmul.mubr.f32.gmra.mrb[0].mxu0 %v724
        %v839 = vpop.f32.mrb[0].mxu0
        %v840 = vadd.f32 0.0, %v839
        %v841 = vpop.f32.mrb[0].mxu0
        %842 = vmatprep.mubr.f32.mxu0 0.0
        %843 = vmatmul.mubr.f32.gmra.mrb[0].mxu0 %v727
        %v844 = vpop.f32.mrb[0].mxu0
        %v845 = vadd.f32 0.0, %v844
        %v846 = vpop.f32.mrb[0].mxu0
        %847 = vmatprep.mubr.f32.mxu0 0.0
        %848 = vmatmul.mubr.f32.gmra.mrb[0].mxu0 %v730
        %v849 = vpop.f32.mrb[0].mxu0
        %v850 = vadd.f32 0.0, %v849
        %v851 = vpop.f32.mrb[0].mxu0
        %852 = vmatprep.mubr.f32.mxu0 0.0
        %853 = vmatmul.mubr.f32.gmra.mrb[0].mxu0 %v733
        %v854 = vpop.f32.mrb[0].mxu0
        %v855 = vadd.f32 0.0, %v854
        %v856 = vpop.f32.mrb[0].mxu0
        %857 = vmatprep.mubr.f32.mxu0 0.0
        %858 = vmatmul.mubr.f32.gmra.mrb[0].mxu0 %v736
        %v859 = vpop.f32.mrb[0].mxu0
        %v860 = vadd.f32 0.0, %v859
        %v861 = vpop.f32.mrb[0].mxu0
        %862 = vmatprep.mubr.f32.mxu0 0.0
        %863 = vmatmul.mubr.f32.gmra.mrb[0].mxu0 %v739
        %v864 = vpop.f32.mrb[0].mxu0
        %v865 = vadd.f32 0.0, %v864
        %v866 = vpop.f32.mrb[0].mxu0
        %867 = vmatprep.mubr.f32.mxu0 0.0
        %868 = vmatmul.mubr.f32.gmra.mrb[0].mxu0 %v742
        %v869 = vpop.f32.mrb[0].mxu0
        %v870 = vadd.f32 0.0, %v869
        %v871 = vpop.f32.mrb[0].mxu0
        %872 = vmatprep.mubr.f32.mxu0 0.0
        %873 = vmatmul.mubr.f32.gmra.mrb[0].mxu0 %v745
        %v874 = vpop.f32.mrb[0].mxu0
        %v875 = vadd.f32 0.0, %v874
        %v876 = vpop.f32.mrb[0].mxu0
        %877 = vmatprep.mubr.f32.mxu0 0.0
        %878 = vmatmul.mubr.f32.gmra.mrb[0].mxu0 %v748
        %v879 = vpop.f32.mrb[0].mxu0
        %v880 = vadd.f32 0.0, %v879
        %v881 = vpop.f32.mrb[0].mxu0
        %882 = vmatprep.mubr.f32.mxu0 0.0
        %883 = vmatmul.mubr.f32.gmra.mrb[0].mxu0 %v751
        %v884 = vpop.f32.mrb[0].mxu0
        %v885 = vadd.f32 0.0, %v884
        %v886 = vpop.f32.mrb[0].mxu0
        %887 = vmatprep.mubr.f32.mxu0 0.0
        %888 = vmatmul.mubr.f32.gmra.mrb[0].mxu0 %v754
        %v889 = vpop.f32.mrb[0].mxu0
        %v890 = vadd.f32 0.0, %v889
        %v891 = vpop.f32.mrb[0].mxu0
        %892 = vmatprep.mubr.f32.mxu0 0.0
        %893 = vmatmul.mubr.f32.gmra.mrb[0].mxu0 %v757
        %v894 = vpop.f32.mrb[0].mxu0
        %v895 = vadd.f32 0.0, %v894
        %v896 = vpop.f32.mrb[0].mxu0
        %897 = vmatprep.mubr.f32.mxu0 0.0
        %898 = vmatmul.mubr.f32.gmra.mrb[0].mxu0 %v760
        %v899 = vpop.f32.mrb[0].mxu0
        %v900 = vadd.f32 0.0, %v899
        %v901 = vpop.f32.mrb[0].mxu0
        %902 = vmatprep.mubr.f32.mxu0 0.0
        %903 = vmatmul.mubr.f32.gmra.mrb[0].mxu0 %v763
        %v904 = vpop.f32.mrb[0].mxu0
        %v905 = vadd.f32 0.0, %v904
        %v906 = vpop.f32.mrb[0].mxu0
        %907 = vmatprep.mubr.f32.mxu0 0.0
        %908 = vmatmul.mubr.f32.gmra.mrb[0].mxu0 %v766
        %v909 = vpop.f32.mrb[0].mxu0
        %v910 = vadd.f32 0.0, %v909
        %v911 = vpop.f32.mrb[0].mxu0
        %912 = vdwg.mxu0
        %v913 = vadd.f32 %v532, %v835
        %v914 = vadd.f32 %v537, %v840
        %v915 = vadd.f32 %v542, %v845
        %v916 = vadd.f32 %v547, %v850
        %v917 = vadd.f32 %v552, %v855
        %v918 = vadd.f32 %v557, %v860
        %v919 = vadd.f32 %v562, %v865
        %v920 = vadd.f32 %v567, %v870
        %v921 = vadd.f32 %v572, %v875
        %v922 = vadd.f32 %v577, %v880
        %v923 = vadd.f32 %v582, %v885
        %v924 = vadd.f32 %v587, %v890
        %v925 = vadd.f32 %v592, %v895
        %v926 = vadd.f32 %v597, %v900
        %v927 = vadd.f32 %v602, %v905
        %v928 = vadd.f32 %v607, %v910
        %v929 = vtanh.pop %v913
        %v930 = vtanh.pop %v914
        %v931 = vtanh.pop %v915
        %v932 = vtanh.pop %v916
        %v933 = vtanh.pop %v917
        %v934 = vtanh.pop %v918
        %v935 = vtanh.pop %v919
        %v936 = vtanh.pop %v920
        %v937 = vtanh.pop %v921
        %v938 = vtanh.pop %v922
        %v939 = vtanh.pop %v923
        %v940 = vtanh.pop %v924
        %v941 = vtanh.pop %v925
        %v942 = vtanh.pop %v926
        %v943 = vtanh.pop %v927
        %v944 = vtanh.pop %v928
        %v945 = vld [vmem:[#allocation8] sm:$0x1]
        %v947 = vlaneseq
        %v948 = vshrl.u32 %v947, 7
        %v949 = vsub.s32 0, %v948
        %v950 = vrot.slane %v945, %v949
        %v952 = vmul.f32 %v929, %v950
        %v953 = vmul.f32 %v930, %v950
        %v954 = vmul.f32 %v931, %v950
        %v955 = vmul.f32 %v932, %v950
        %v956 = vmul.f32 %v933, %v950
        %v957 = vmul.f32 %v934, %v950
        %v958 = vmul.f32 %v935, %v950
        %v959 = vmul.f32 %v936, %v950
        %v960 = vmul.f32 %v937, %v950
        %v961 = vmul.f32 %v938, %v950
        %v962 = vmul.f32 %v939, %v950
        %v963 = vmul.f32 %v940, %v950
        %v964 = vmul.f32 %v941, %v950
        %v965 = vmul.f32 %v942, %v950
        %v966 = vmul.f32 %v943, %v950
        %v967 = vmul.f32 %v944, %v950
        %968 = vadd.xlane.f32.xlu0 %v952
        %v969 = vpop.xlane.xlu0 %968
        %970 = vadd.xlane.f32.xlu0 %v953
        %v971 = vpop.xlane.xlu0 %970
        %972 = vadd.xlane.f32.xlu0 %v954
        %v973 = vpop.xlane.xlu0 %972
        %974 = vadd.xlane.f32.xlu0 %v955
        %v975 = vpop.xlane.xlu0 %974
        %976 = vadd.xlane.f32.xlu0 %v956
        %v977 = vpop.xlane.xlu0 %976
        %978 = vadd.xlane.f32.xlu0 %v957
        %v979 = vpop.xlane.xlu0 %978
        %980 = vadd.xlane.f32.xlu0 %v958
        %v981 = vpop.xlane.xlu0 %980
        %982 = vadd.xlane.f32.xlu0 %v959
        %v983 = vpop.xlane.xlu0 %982
        %984 = vadd.xlane.f32.xlu0 %v960
        %v985 = vpop.xlane.xlu0 %984
        %986 = vadd.xlane.f32.xlu0 %v961
        %v987 = vpop.xlane.xlu0 %986
        %988 = vadd.xlane.f32.xlu0 %v962
        %v989 = vpop.xlane.xlu0 %988
        %990 = vadd.xlane.f32.xlu0 %v963
        %v991 = vpop.xlane.xlu0 %990
        %992 = vadd.xlane.f32.xlu0 %v964
        %v993 = vpop.xlane.xlu0 %992
        %994 = vadd.xlane.f32.xlu0 %v965
        %v995 = vpop.xlane.xlu0 %994
        %996 = vadd.xlane.f32.xlu0 %v966
        %v997 = vpop.xlane.xlu0 %996
        %998 = vadd.xlane.f32.xlu0 %v967
        %v999 = vpop.xlane.xlu0 %998
        %v1000 = vld [vmem:[#allocation2] sm:$0x1]
        %v1002 = vlaneseq
        %v1003 = vshrl.u32 %v1002, 7
        %v1004 = vsub.s32 0, %v1003
        %v1005 = vrot.slane %v1000, %v1004
        %v1007 = vadd.f32 %v969, %v1005
        %v1008 = vadd.f32 %v971, %v1005
        %v1009 = vadd.f32 %v973, %v1005
        %v1010 = vadd.f32 %v975, %v1005
        %v1011 = vadd.f32 %v977, %v1005
        %v1012 = vadd.f32 %v979, %v1005
        %v1013 = vadd.f32 %v981, %v1005
        %v1014 = vadd.f32 %v983, %v1005
        %v1015 = vadd.f32 %v985, %v1005
        %v1016 = vadd.f32 %v987, %v1005
        %v1017 = vadd.f32 %v989, %v1005
        %v1018 = vadd.f32 %v991, %v1005
        %v1019 = vadd.f32 %v993, %v1005
        %v1020 = vadd.f32 %v995, %v1005
        %v1021 = vadd.f32 %v997, %v1005
        %v1022 = vadd.f32 %v999, %v1005
        %vm1023 = vcmask 7168
        %v1024 = vsel %vm1023, %v1007, -inf
        %v1025 = vsel %vm1023, %v1008, -inf
        %v1026 = vsel %vm1023, %v1009, -inf
        %v1027 = vsel %vm1023, %v1010, -inf
        %v1028 = vsel %vm1023, %v1011, -inf
        %v1029 = vmax.f32 %v1024, %v1028
        %v1030 = vsel %vm1023, %v1012, -inf
        %v1031 = vmax.f32 %v1025, %v1030
        %v1032 = vsel %vm1023, %v1013, -inf
        %v1033 = vmax.f32 %v1026, %v1032
        %v1034 = vsel %vm1023, %v1014, -inf
        %v1035 = vmax.f32 %v1027, %v1034
        %v1036 = vsel %vm1023, %v1015, -inf
        %v1037 = vmax.f32 %v1029, %v1036
        %v1038 = vsel %vm1023, %v1016, -inf
        %v1039 = vmax.f32 %v1031, %v1038
        %v1040 = vsel %vm1023, %v1017, -inf
        %v1041 = vmax.f32 %v1033, %v1040
        %v1042 = vsel %vm1023, %v1018, -inf
        %v1043 = vmax.f32 %v1035, %v1042
        %v1044 = vsel %vm1023, %v1019, -inf
        %v1045 = vmax.f32 %v1037, %v1044
        %v1046 = vsel %vm1023, %v1020, -inf
        %v1047 = vmax.f32 %v1039, %v1046
        %v1048 = vsel %vm1023, %v1021, -inf
        %v1049 = vmax.f32 %v1041, %v1048
        %v1050 = vsel %vm1023, %v1022, -inf
        %v1051 = vmax.f32 %v1043, %v1050
        %v1052 = vmax.f32 %v1045, %v1047
        %v1053 = vmax.f32 %v1049, %v1051
        %v1054 = vmax.f32 %v1052, %v1053
        %v1055 = vrot.slane %v1054, 4
        %v1056 = vmax.f32 %v1054, %v1055
        %v1057 = vrot.slane %v1056, 2
        %v1058 = vmax.f32 %v1056, %v1057
        %v1059 = vrot.slane %v1058, 1
        %v1060 = vmax.f32 %v1058, %v1059
        %v1061 = vsub.f32 %v1007, %v1060
        %v1062 = vsub.f32 %v1008, %v1060
        %v1063 = vsub.f32 %v1009, %v1060
        %v1064 = vsub.f32 %v1010, %v1060
        %v1065 = vsub.f32 %v1011, %v1060
        %v1066 = vsub.f32 %v1012, %v1060
        %v1067 = vsub.f32 %v1013, %v1060
        %v1068 = vsub.f32 %v1014, %v1060
        %v1069 = vsub.f32 %v1015, %v1060
        %v1070 = vsub.f32 %v1016, %v1060
        %v1071 = vsub.f32 %v1017, %v1060
        %v1072 = vsub.f32 %v1018, %v1060
        %v1073 = vsub.f32 %v1019, %v1060
        %v1074 = vsub.f32 %v1020, %v1060
        %v1075 = vsub.f32 %v1021, %v1060
        %v1076 = vsub.f32 %v1022, %v1060
        %v1077 = vmul.f32 %v1061, 1.442695
        %v1078 = vpow.pop %v1077
        %v1079 = vmul.f32 %v1062, 1.442695
        %v1080 = vpow.pop %v1079
        %v1081 = vmul.f32 %v1063, 1.442695
        %v1082 = vpow.pop %v1081
        %v1083 = vmul.f32 %v1064, 1.442695
        %v1084 = vpow.pop %v1083
        %v1085 = vmul.f32 %v1065, 1.442695
        %v1086 = vpow.pop %v1085
        %v1087 = vmul.f32 %v1066, 1.442695
        %v1088 = vpow.pop %v1087
        %v1089 = vmul.f32 %v1067, 1.442695
        %v1090 = vpow.pop %v1089
        %v1091 = vmul.f32 %v1068, 1.442695
        %v1092 = vpow.pop %v1091
        %v1093 = vmul.f32 %v1069, 1.442695
        %v1094 = vpow.pop %v1093
        %v1095 = vmul.f32 %v1070, 1.442695
        %v1096 = vpow.pop %v1095
        %v1097 = vmul.f32 %v1071, 1.442695
        %v1098 = vpow.pop %v1097
        %v1099 = vmul.f32 %v1072, 1.442695
        %v1100 = vpow.pop %v1099
        %v1101 = vmul.f32 %v1073, 1.442695
        %v1102 = vpow.pop %v1101
        %v1103 = vmul.f32 %v1074, 1.442695
        %v1104 = vpow.pop %v1103
        %v1105 = vmul.f32 %v1075, 1.442695
        %v1106 = vpow.pop %v1105
        %v1107 = vmul.f32 %v1076, 1.442695
        %v1108 = vpow.pop %v1107
        %v1109 = vld [vmem:[%s9] sm:$0xff]
        %1111 = vset.pattern.permute.xlu0 0
        %1112 = vperm.xlu0 %1111, %v1078
        %v1113 = vpop.permute.xlu0 %1112
        %1116 = vset.pattern.permute.xlu0 0
        %1117 = vperm.xlu0 %1116, %v1080
        %v1118 = vpop.permute.xlu0 %1117
        %1121 = vset.pattern.permute.xlu0 0
        %1122 = vperm.xlu0 %1121, %v1082
        %v1123 = vpop.permute.xlu0 %1122
        %1126 = vset.pattern.permute.xlu0 0
        %1127 = vperm.xlu0 %1126, %v1084
        %v1128 = vpop.permute.xlu0 %1127
        %1131 = vset.pattern.permute.xlu0 0
        %1132 = vperm.xlu0 %1131, %v1086
        %v1133 = vpop.permute.xlu0 %1132
        %1136 = vset.pattern.permute.xlu0 0
        %1137 = vperm.xlu0 %1136, %v1088
        %v1138 = vpop.permute.xlu0 %1137
        %1141 = vset.pattern.permute.xlu0 0
        %1142 = vperm.xlu0 %1141, %v1090
        %v1143 = vpop.permute.xlu0 %1142
        %1146 = vset.pattern.permute.xlu0 0
        %1147 = vperm.xlu0 %1146, %v1092
        %v1148 = vpop.permute.xlu0 %1147
        %1151 = vset.pattern.permute.xlu0 0
        %1152 = vperm.xlu0 %1151, %v1094
        %v1153 = vpop.permute.xlu0 %1152
        %1156 = vset.pattern.permute.xlu0 0
        %1157 = vperm.xlu0 %1156, %v1096
        %v1158 = vpop.permute.xlu0 %1157
        %1161 = vset.pattern.permute.xlu0 0
        %1162 = vperm.xlu0 %1161, %v1098
        %v1163 = vpop.permute.xlu0 %1162
        %1166 = vset.pattern.permute.xlu0 0
        %1167 = vperm.xlu0 %1166, %v1100
        %v1168 = vpop.permute.xlu0 %1167
        %1171 = vset.pattern.permute.xlu0 0
        %1172 = vperm.xlu0 %1171, %v1102
        %v1173 = vpop.permute.xlu0 %1172
        %1176 = vset.pattern.permute.xlu0 0
        %1177 = vperm.xlu0 %1176, %v1104
        %v1178 = vpop.permute.xlu0 %1177
        %1181 = vset.pattern.permute.xlu0 0
        %1182 = vperm.xlu0 %1181, %v1106
        %v1183 = vpop.permute.xlu0 %1182
        %1186 = vset.pattern.permute.xlu0 0
        %1187 = vperm.xlu0 %1186, %v1108
        %v1188 = vpop.permute.xlu0 %1187
        %v1190 = vmul.f32 %v1113, %v425
        %v1191 = vmul.f32 %v1118, %v426
        %v1192 = vmul.f32 %v1123, %v427
        %v1193 = vmul.f32 %v1128, %v428
        %v1194 = vmul.f32 %v1133, %v429
        %v1195 = vmul.f32 %v1138, %v430
        %v1196 = vmul.f32 %v1143, %v431
        %v1197 = vmul.f32 %v1148, %v432
        %v1198 = vmul.f32 %v1153, %v433
        %v1199 = vmul.f32 %v1158, %v434
        %v1200 = vmul.f32 %v1163, %v435
        %v1201 = vmul.f32 %v1168, %v436
        %v1202 = vmul.f32 %v1173, %v437
        %v1203 = vmul.f32 %v1178, %v438
        %v1204 = vmul.f32 %v1183, %v439
        %v1205 = vmul.f32 %v1188, %v440
        %1206 = vmatprep.subr.mxu0 0.0
        %1207 = vmatpush1.msra.mxu0 %v1190
        %1208 = vmatprep.subr.mxu0 0.0
        %1209 = vmatpush1.msra.mxu0 %v1191
        %1210 = vmatprep.subr.mxu0 0.0
        %1211 = vmatpush1.msra.mxu0 %v1192
        %1212 = vmatprep.subr.mxu0 0.0
        %1213 = vmatpush1.msra.mxu0 %v1193
        %1214 = vmatprep.subr.mxu0 0.0
        %1215 = vmatpush1.msra.mxu0 %v1194
        %1216 = vmatprep.subr.mxu0 0.0
        %1217 = vmatpush1.msra.mxu0 %v1195
        %1218 = vmatprep.subr.mxu0 0.0
        %1219 = vmatpush1.msra.mxu0 %v1196
        %1220 = vmatprep.subr.mxu0 0.0
        %1221 = vmatpush1.msra.mxu0 %v1197
        %1222 = vmatprep.subr.mxu0 0.0
        %1223 = vmatpush1.msra.mxu0 %v1198
        %1224 = vmatprep.subr.mxu0 0.0
        %1225 = vmatpush1.msra.mxu0 %v1199
        %1226 = vmatprep.subr.mxu0 0.0
        %1227 = vmatpush1.msra.mxu0 %v1200
        %1228 = vmatprep.subr.mxu0 0.0
        %1229 = vmatpush1.msra.mxu0 %v1201
        %1230 = vmatprep.subr.mxu0 0.0
        %1231 = vmatpush1.msra.mxu0 %v1202
        %1232 = vmatprep.subr.mxu0 0.0
        %1233 = vmatpush1.msra.mxu0 %v1203
        %1234 = vmatprep.subr.mxu0 0.0
        %1235 = vmatpush1.msra.mxu0 %v1204
        %1236 = vmatprep.subr.mxu0 0.0
        %1237 = vmatpush1.msra.mxu0 %v1205
        %1238 = vmatprep.subr.mxu0 0.0
        %1239 = vmatpush1.msra.mxu0 0.0
        %1240 = vmatprep.subr.mxu0 0.0
        %1241 = vmatpush1.msra.mxu0 0.0
        %1242 = vmatprep.subr.mxu0 0.0
        %1243 = vmatpush1.msra.mxu0 0.0
        %1244 = vmatprep.subr.mxu0 0.0
        %1245 = vmatpush1.msra.mxu0 0.0
        %1246 = vmatprep.subr.mxu0 0.0
        %1247 = vmatpush1.msra.mxu0 0.0
        %1248 = vmatprep.subr.mxu0 0.0
        %1249 = vmatpush1.msra.mxu0 0.0
        %1250 = vmatprep.subr.mxu0 0.0
        %1251 = vmatpush1.msra.mxu0 0.0
        %1252 = vmatprep.subr.mxu0 0.0
        %1253 = vmatpush1.msra.mxu0 0.0
        %1254 = vmatprep.subr.mxu0 0.0
        %1255 = vmatpush1.msra.mxu0 0.0
        %1256 = vmatprep.subr.mxu0 0.0
        %1257 = vmatpush1.msra.mxu0 0.0
        %1258 = vmatprep.subr.mxu0 0.0
        %1259 = vmatpush1.msra.mxu0 0.0
        %1260 = vmatprep.subr.mxu0 0.0
        %1261 = vmatpush1.msra.mxu0 0.0
        %1262 = vmatprep.subr.mxu0 0.0
        %1263 = vmatpush1.msra.mxu0 0.0
        %1264 = vmatprep.subr.mxu0 0.0
        %1265 = vmatpush1.msra.mxu0 0.0
        %1266 = vmatprep.subr.mxu0 0.0
        %1267 = vmatpush1.msra.mxu0 0.0
        %1268 = vmatprep.subr.mxu0 0.0
        %1269 = vmatpush1.msra.mxu0 0.0
        %1270 = vmatprep.mubr.f32.mxu0 0.0
        %1271 = vmatmul.mubr.f32.gmra.mrb[0].mxu0 %v1109
        %v1272 = vpop.f32.mrb[0].mxu0
        %v1273 = vadd.f32 0.0, %v1272
        %v1274 = vpop.f32.mrb[0].mxu0
        %1275 = vdwg.mxu0
        %1276 = vmatprep.subr.mxu0 0.0
        %1277 = vmatpush1.msra.mxu0 %v1078
        %1278 = vmatprep.subr.mxu0 0.0
        %1279 = vmatpush1.msra.mxu0 %v1080
        %1280 = vmatprep.subr.mxu0 0.0
        %1281 = vmatpush1.msra.mxu0 %v1082
        %1282 = vmatprep.subr.mxu0 0.0
        %1283 = vmatpush1.msra.mxu0 %v1084
        %1284 = vmatprep.subr.mxu0 0.0
        %1285 = vmatpush1.msra.mxu0 %v1086
        %1286 = vmatprep.subr.mxu0 0.0
        %1287 = vmatpush1.msra.mxu0 %v1088
        %1288 = vmatprep.subr.mxu0 0.0
        %1289 = vmatpush1.msra.mxu0 %v1090
        %1290 = vmatprep.subr.mxu0 0.0
        %1291 = vmatpush1.msra.mxu0 %v1092
        %1292 = vmatprep.subr.mxu0 0.0
        %1293 = vmatpush1.msra.mxu0 %v1094
        %1294 = vmatprep.subr.mxu0 0.0
        %1295 = vmatpush1.msra.mxu0 %v1096
        %1296 = vmatprep.subr.mxu0 0.0
        %1297 = vmatpush1.msra.mxu0 %v1098
        %1298 = vmatprep.subr.mxu0 0.0
        %1299 = vmatpush1.msra.mxu0 %v1100
        %1300 = vmatprep.subr.mxu0 0.0
        %1301 = vmatpush1.msra.mxu0 %v1102
        %1302 = vmatprep.subr.mxu0 0.0
        %1303 = vmatpush1.msra.mxu0 %v1104
        %1304 = vmatprep.subr.mxu0 0.0
        %1305 = vmatpush1.msra.mxu0 %v1106
        %1306 = vmatprep.subr.mxu0 0.0
        %1307 = vmatpush1.msra.mxu0 %v1108
        %1308 = vmatprep.subr.mxu0 0.0
        %1309 = vmatpush1.msra.mxu0 0.0
        %1310 = vmatprep.subr.mxu0 0.0
        %1311 = vmatpush1.msra.mxu0 0.0
        %1312 = vmatprep.subr.mxu0 0.0
        %1313 = vmatpush1.msra.mxu0 0.0
        %1314 = vmatprep.subr.mxu0 0.0
        %1315 = vmatpush1.msra.mxu0 0.0
        %1316 = vmatprep.subr.mxu0 0.0
        %1317 = vmatpush1.msra.mxu0 0.0
        %1318 = vmatprep.subr.mxu0 0.0
        %1319 = vmatpush1.msra.mxu0 0.0
        %1320 = vmatprep.subr.mxu0 0.0
        %1321 = vmatpush1.msra.mxu0 0.0
        %1322 = vmatprep.subr.mxu0 0.0
        %1323 = vmatpush1.msra.mxu0 0.0
        %1324 = vmatprep.subr.mxu0 0.0
        %1325 = vmatpush1.msra.mxu0 0.0
        %1326 = vmatprep.subr.mxu0 0.0
        %1327 = vmatpush1.msra.mxu0 0.0
        %1328 = vmatprep.subr.mxu0 0.0
        %1329 = vmatpush1.msra.mxu0 0.0
        %1330 = vmatprep.subr.mxu0 0.0
        %1331 = vmatpush1.msra.mxu0 0.0
        %1332 = vmatprep.subr.mxu0 0.0
        %1333 = vmatpush1.msra.mxu0 0.0
        %1334 = vmatprep.subr.mxu0 0.0
        %1335 = vmatpush1.msra.mxu0 0.0
        %1336 = vmatprep.subr.mxu0 0.0
        %1337 = vmatpush1.msra.mxu0 0.0
        %1338 = vmatprep.subr.mxu0 0.0
        %1339 = vmatpush1.msra.mxu0 0.0
        %1340 = vmatprep.mubr.f32.mxu0 0.0
        %1341 = vmatmul.mubr.f32.gmra.mrb[0].mxu0 %v1109
        %v1342 = vpop.f32.mrb[0].mxu0
        %v1343 = vadd.f32 0.0, %v1342
        %v1344 = vpop.f32.mrb[0].mxu0
        %1345 = vdwg.mxu0
        %v1346 = vrcp.pop %v1343
        %1348 = vset.pattern.permute.xlu0 0
        %1349 = vperm.xlu0 %1348, %v1346
        %v1350 = vpop.permute.xlu0 %1349
        %v1352 = vmul.f32 %v1273, %v1350
        %v1353 = vadd.f32 %v1352, %v441
        %1354 = vst [vmem:[%s419] sm:$0xff] %v1353
        %s1355 = sand.u32 %s258, 1
        %s1356 = scalar_lea.sflag [#allocation5], %s1355
        %s1357 = sand.u32 %s258, 1
        %s1358 = smul.addr %s1357, 8
        %s1359 = scalar_lea.vmem [#allocation9], %s1358
        // Predicated region
        $region73: #{tpu_custom_call.1} parent=59 // pred_check
          %p1360 = pneg %p268
        $region74: #{tpu_custom_call.1} parent=59 // pred_check_branch
          %1362 = sbr.rel (%p1360) target = $region76
        $region75: #{tpu_custom_call.1} parent=59 // pred_region
          %s1364 = ssub.s32 128, 128
          %1365 = vsyncadd %s1356, %s1364
          %s1366 = smul.addr %s30, 128
          %s1367 = scalar_lea.hbm %s10, %s1366
          %s1369 = sshll.u32 %s1359, 4
          %s1370 = int_to_ptr.vmem [resolvable:$true] %s1369
          %1372 = dma.vmem_to_hbm [thread:$0]  %s1370, 128, %s1367, %s1356
        $region76: #{tpu_custom_call.1} parent=59 // pred_fallthru
          _
      $region60: #{tpu_custom_call.1} parent=5 // pred_fallthru
        _
      %p1373 = scmp.le.s32.totalorder 2, %s25
      // Predicated region
      $region77: #{tpu_custom_call.1} parent=5 // pred_check
        %p1374 = pneg %p1373
      $region78: #{tpu_custom_call.1} parent=5 // pred_check_branch
        %1376 = sbr.rel (%p1374) target = $region80
      $region79: #{tpu_custom_call.1} parent=5 // pred_region
        %s1377 = ssub.s32 %s25, 2
        // Predicated region
        $region81: #{tpu_custom_call.1} parent=79 // pred_check
          %p1378 = pneg %p274
        $region82: #{tpu_custom_call.1} parent=79 // pred_check_branch
          %1380 = sbr.rel (%p1378) target = $region84
        $region83: #{tpu_custom_call.1} parent=79 // pred_region
          %s1381 = sand.u32 %s259, 1
          %s1382 = scalar_lea.sflag [#allocation5], %s1381
          %s1383 = sand.u32 %s259, 1
          %s1384 = smul.addr %s1383, 8
          %s1385 = scalar_lea.vmem [#allocation9], %s1384
          %1386 = dma.done %s1382, 128
        $region84: #{tpu_custom_call.1} parent=79 // pred_fallthru
          _
      $region80: #{tpu_custom_call.1} parent=5 // pred_fallthru
        _
    $region6: #{tpu_custom_call.1} parent=1 // loop_footer
      %s29 = sadd.s32 1, %s25
    $region7: #{tpu_custom_call.1} parent=1 // loop_footer_branch
      %24 = sbr.rel target = $region3
    $region8: #{tpu_custom_call.1} parent=1 // loop_exit
      _
    %1387 = vsyncpa [#allocation4], 1
    %s1388 = scalar_lea.sflag [#allocation4], 1
    %1389 = vsyncpa %s1388, 1
    %1390 = vsyncpa [#allocation7], 1
    %1391 = vsyncpa [#allocation5], 1
    %s1392 = scalar_lea.sflag [#allocation5], 1
    %1393 = vsyncpa %s1392, 1

</llo_original>
